<compile_context>
chip_gen: v6e
topology: v6e:2x2x1
jax: 0.10.0
libtpu: 0.0.40
codegen_flags: <defaults>
</compile_context>

<pallas_src>
import numpy as np
import jax
import jax.numpy as jnp
from jax.experimental import pallas as pl
from jax.experimental.pallas import tpu as pltpu

# ---------------------------------------------------------------------------
# Fixed layer geometry for this ConvNet configuration
# ---------------------------------------------------------------------------
CIN, H, W = 4, 16, 16            # input  (N, 4, 16, 16) NCHW
C1, KH, KW = 8, 3, 3             # conv1: 4 -> 8, k3, s1
HO1, WO1 = 14, 14                # (16 - 3) // 1 + 1
C2 = 16                          # conv2: 8 -> 16, k3, s2
HO2, WO2 = 6, 6                  # (14 - 3) // 2 + 1
F1 = 32                          # fc1 units
OUT = 10                         # output_size
LANE = 128                       # lane-tile width (all packed K chunks / outputs)
R1 = 16                          # rows per sample in conv1 slabs (HO1=14 -> 16)
R2 = 8                           # rows per sample in conv2 slabs (HO2=6  -> 8)


# ---------------------------------------------------------------------------
# One-time parameter preparation (layout packing, lane padding, bf16 cast).
# ---------------------------------------------------------------------------
def prepare_params(params):
    w1 = np.asarray(params["conv1_w"], np.float32)   # (8, 4, 3, 3)  OIHW
    b1 = np.asarray(params["conv1_b"], np.float32)
    w2 = np.asarray(params["conv2_w"], np.float32)   # (16, 8, 3, 3)
    b2 = np.asarray(params["conv2_b"], np.float32)
    wf1 = np.asarray(params["fc1_w"], np.float32)    # (32, 576) torch (out, in)
    bf1 = np.asarray(params["fc1_b"], np.float32)
    wf2 = np.asarray(params["fc2_w"], np.float32)    # (10, 32)
    bf2 = np.asarray(params["fc2_b"], np.float32)

    # conv1 as one matmul over rows (n, ho1):
    #   LHS col = i*128 + w*CIN + ci ;  out col = wo1*C1 + co  (padded to 128)
    W1 = np.zeros((KH * LANE, LANE), np.float32)
    for i in range(KH):
        for j in range(KW):
            blk = w1[:, :, i, j].T                      # (ci, co)
            for wo in range(WO1):
                w = wo + j
                W1[i * LANE + w * CIN: i * LANE + (w + 1) * CIN,
                   wo * C1: (wo + 1) * C1] = blk
    B1 = np.zeros((LANE,), np.float32)
    B1[:WO1 * C1] = np.tile(b1, WO1)                    # col = wo1*8 + co

    # conv2 (stride 2) as one matmul over rows (n, ho2):
    #   LHS col = i*128 + wo1*C1 + c1 ;  out col = wo2*C2 + c2  (padded to 128)
    W2 = np.zeros((KH * LANE, LANE), np.float32)
    for i in range(KH):
        for j in range(KW):
            blk = w2[:, :, i, j].T                      # (c1, c2)
            for wo2 in range(WO2):
                w1i = 2 * wo2 + j
                W2[i * LANE + w1i * C1: i * LANE + (w1i + 1) * C1,
                   wo2 * C2: (wo2 + 1) * C2] = blk
    B2 = np.zeros((LANE,), np.float32)
    B2[:WO2 * C2] = np.tile(b2, WO2)                    # col = wo2*16 + c2

    # fc1: fold torch's NCHW flatten (c*36 + h*6 + w) into the NHWC row order
    # used inside the kernel (row = h*128 + w*16 + c); pad lanes 96..127 of each
    # chunk stay zero (they only ever see act2's zero pad lanes anyway).
    WF1 = np.zeros((HO2 * LANE, F1), np.float32)
    t = wf1.reshape(F1, C2, HO2, WO2)                   # (u, c, h, w)
    for h in range(HO2):
        blk = np.transpose(t[:, :, h, :], (2, 1, 0)).reshape(WO2 * C2, F1)
        WF1[h * LANE: h * LANE + WO2 * C2, :] = blk

    # fc2: pad the output lanes 10 -> 128 (lane-dense final store).
    WF2 = np.zeros((F1, LANE), np.float32)
    WF2[:, :OUT] = wf2.T
    BF2 = np.zeros((LANE,), np.float32)
    BF2[:OUT] = bf2

    return dict(
        w1=jnp.asarray(W1, jnp.bfloat16), b1=jnp.asarray(B1, jnp.float32).reshape(1, -1),
        w2=jnp.asarray(W2, jnp.bfloat16), b2=jnp.asarray(B2, jnp.float32).reshape(1, -1),
        wf1=jnp.asarray(WF1, jnp.bfloat16), bf1=jnp.asarray(bf1, jnp.float32).reshape(1, -1),
        wf2=jnp.asarray(WF2, jnp.bfloat16), bf2=jnp.asarray(BF2, jnp.float32).reshape(1, -1),
    )


# ---------------------------------------------------------------------------
# Fused forward kernel: conv1 -> relu -> conv2 -> relu -> fc1 -> relu -> fc2
# All intermediates live in VMEM scratch; one MXU matmul per layer.
#
# NOTE on uninitialized pad rows: rows 14..15 of each 16-row conv1 block and
# rows 6..7 of each 8-row conv2 block are never written (may hold stale VMEM).
# Their matmul outputs land in rows that are never read downstream, so this is
# safe; it buys unmasked tile-aligned slab copies and removes all zero fills.
# ---------------------------------------------------------------------------
def _make_convnet_kernel(n):
    def kernel(x_ref, w1_ref, b1_ref, w2_ref, b2_ref, wf1_ref, bf1_ref,
               wf2_ref, bf2_ref, out_ref,
               lhs1_ref, act1_ref, lhs2_ref, act2_ref, lhs3_ref):
        f32, bf16 = jnp.float32, jnp.bfloat16

        # ---- conv1 (4->8, k3, s1): in-kernel im2col + single MXU pass ----
        # lhs1[b*16+ho, i*128 + w*4 + ci] = x[b, ho+i, w, ci]  (lanes 64..127 = 0)
        # Full 128-lane chunk copies; dest row offsets are multiples of 16.
        for b in range(n):
            for i in range(KH):
                lhs1_ref[pl.ds(b * R1, HO1), pl.ds(i * LANE, LANE)] = \
                    x_ref[pl.ds(b * H + i, HO1), :]
        a1 = jnp.dot(lhs1_ref[...], w1_ref[...], preferred_element_type=f32)
        act1_ref[...] = jnp.maximum(a1 + b1_ref[...], 0.0)   # rows=(b,ho1) cols=(wo1,c1)

        # ---- conv2 (8->16, k3, s2): n*KH strided slab copies + one MXU pass ----
        # lhs2[b*8+ho2, i*128 + wo1*8 + c1] = relu1[b, 2*ho2+i, wo1, c1]
        for b in range(n):
            for i in range(KH):
                lhs2_ref[pl.ds(b * R2, HO2), pl.ds(i * LANE, LANE)] = \
                    act1_ref[pl.ds(b * R1 + i, HO2, stride=2), :].astype(bf16)
        a2 = jnp.dot(lhs2_ref[...], w2_ref[...], preferred_element_type=f32)
        act2_ref[...] = jnp.maximum(a2 + b2_ref[...], 0.0)   # rows=(b,ho2) cols=(wo2,c2)

        # ---- fc1 (576 -> 32): NHWC flatten per sample (the torch NCHW-flatten
        # permutation is folded into wf1's rows at prep time); lane-dense rows ----
        for b in range(n):
            for h in range(HO2):
                lhs3_ref[pl.ds(b, 1), pl.ds(h * LANE, LANE)] = \
                    act2_ref[pl.ds(b * R2 + h, 1), :].astype(bf16)
        h1 = jnp.dot(lhs3_ref[...], wf1_ref[...], preferred_element_type=f32)
        h1 = jnp.maximum(h1 + bf1_ref[...], 0.0)              # (n, 32)

        # ---- fc2 (32 -> 10, linear last layer), output lane-padded to 128 ----
        out = jnp.dot(h1.astype(bf16), wf2_ref[...], preferred_element_type=f32)
        out_ref[...] = out + bf2_ref[...]

    return kernel


def convnet_forward(prepped, x):
    """x: (N, 4, 16, 16) NCHW float32 -> (N, 10) float32."""
    n = x.shape[0]
    # One-time layout work per forward: NCHW -> row-major NHWC rows, pad lanes
    # 64 -> 128 with zeros, cast to bf16 (halves every in-kernel copy byte).
    x_rows = jnp.transpose(x, (0, 2, 3, 1)).reshape(n * H, W * CIN)
    x_rows = jnp.pad(x_rows, ((0, 0), (0, LANE - W * CIN))).astype(jnp.bfloat16)

    out_padded = pl.pallas_call(
        _make_convnet_kernel(n),
        out_shape=jax.ShapeDtypeStruct((n, LANE), jnp.float32),
        scratch_shapes=[
            pltpu.VMEM((n * R1, KH * LANE), jnp.bfloat16),   # conv1 im2col slab
            pltpu.VMEM((n * R1, LANE), jnp.float32),         # conv1 activations
            pltpu.VMEM((n * R2, KH * LANE), jnp.bfloat16),   # conv2 im2col slab
            pltpu.VMEM((n * R2, LANE), jnp.float32),         # conv2 activations
            pltpu.VMEM((n, HO2 * LANE), jnp.bfloat16),       # fc1 input slab
        ],
        # NOTE: for large batches, add a batch grid axis with
        # dimension_semantics=("parallel",) (uses both v7x TensorCores); size the
        # per-step batch tile so scratch + double-buffered inputs fit v7x's
        # 64 MiB VMEM and M per MXU pass is a multiple of 256 (128 on v5e).
        # At N=2 a grid is pure overhead.
    )(x_rows, prepped["w1"], prepped["b1"], prepped["w2"], prepped["b2"],
      prepped["wf1"], prepped["bf1"], prepped["wf2"], prepped["bf2"])

    return out_padded[:, :OUT]
    # TODO(synk): batch_norm / group_norm / film / preserve_shape branches of
    # ConvNet are disabled in this configuration and therefore not implemented.


# ---------------------------------------------------------------------------
# Parameters (deterministic synthetic init; shapes follow ConvNet.__init__)
# ---------------------------------------------------------------------------
def init_params(key):
    ks = jax.random.split(key, 8)
    p = {}
    p["conv1_w"] = 0.1 * jax.random.normal(ks[0], (C1, CIN, KH, KW), jnp.float32)
    p["conv1_b"] = 0.1 * jax.random.normal(ks[1], (C1,), jnp.float32)
    p["conv2_w"] = 0.1 * jax.random.normal(ks[2], (C2, C1, KH, KW), jnp.float32)
    p["conv2_b"] = 0.1 * jax.random.normal(ks[3], (C2,), jnp.float32)
    p["fc1_w"] = 0.1 * jax.random.normal(ks[4], (F1, C2 * HO2 * WO2), jnp.float32)
    p["fc1_b"] = 0.1 * jax.random.normal(ks[5], (F1,), jnp.float32)
    p["fc2_w"] = 0.1 * jax.random.normal(ks[6], (OUT, F1), jnp.float32)
    p["fc2_b"] = 0.1 * jax.random.normal(ks[7], (OUT,), jnp.float32)
    return p


# ---------------------------------------------------------------------------
# Pure-JAX (f32) reference of the PyTorch forward, for a correctness check.
# ---------------------------------------------------------------------------
def reference_forward(params, x):
    dn = ("NCHW", "OIHW", "NCHW")
    y = jax.lax.conv_general_dilated(x, params["conv1_w"], (1, 1), "VALID",
                                     dimension_numbers=dn)
    y = jax.nn.relu(y + params["conv1_b"][None, :, None, None])
    y = jax.lax.conv_general_dilated(y, params["conv2_w"], (2, 2), "VALID",
                                     dimension_numbers=dn)
    y = jax.nn.relu(y + params["conv2_b"][None, :, None, None])
    y = y.reshape(y.shape[0], -1)                          # torch NCHW flatten
    y = jax.nn.relu(y @ params["fc1_w"].T + params["fc1_b"])
    return y @ params["fc2_w"].T + params["fc2_b"]


if __name__ == "__main__":
    key = jax.random.PRNGKey(0)
    pkey, xkey = jax.random.split(key)
    params = init_params(pkey)
    prepped = prepare_params(params)                        # one-time layout prep
    x = jax.random.normal(xkey, (2, CIN, H, W), jnp.float32)  # NCHW, like PyTorch

    out = jax.jit(convnet_forward)(prepped, x)
    out = jax.block_until_ready(out)

    assert out.shape == (2, OUT), out.shape
    assert out.dtype == jnp.float32
    assert bool(jnp.all(jnp.isfinite(out)))

    ref = reference_forward(params, x)
    err = float(jnp.max(jnp.abs(out - ref)))
    assert err < 5e-2, f"max abs err vs f32 reference: {err}"

    print("KERNEL_OK")
</pallas_src>

<mosaic_0001>
module attributes {stable_mosaic.version = 11 : i64} {
  func.func @kernel(%arg0: memref<32x128xbf16, #tpu.memory_space<vmem>>, %arg1: memref<384x128xbf16, #tpu.memory_space<vmem>>, %arg2: memref<1x128xf32, #tpu.memory_space<vmem>>, %arg3: memref<384x128xbf16, #tpu.memory_space<vmem>>, %arg4: memref<1x128xf32, #tpu.memory_space<vmem>>, %arg5: memref<768x32xbf16, #tpu.memory_space<vmem>>, %arg6: memref<1x32xf32, #tpu.memory_space<vmem>>, %arg7: memref<32x128xbf16, #tpu.memory_space<vmem>>, %arg8: memref<1x128xf32, #tpu.memory_space<vmem>>, %arg9: memref<2x128xf32, #tpu.memory_space<vmem>>, %arg10: memref<32x384xbf16, #tpu.memory_space<vmem>>, %arg11: memref<32x128xf32, #tpu.memory_space<vmem>>, %arg12: memref<16x384xbf16, #tpu.memory_space<vmem>>, %arg13: memref<16x128xf32, #tpu.memory_space<vmem>>, %arg14: memref<2x768xbf16, #tpu.memory_space<vmem>>) attributes {dimension_semantics = [], scalar_prefetch = 0 : i64, scratch_operands = 5 : i64, tpu.core_type = #tpu.core_type<tc>} {
    %c0 = arith.constant 0 : index
    %c0_0 = arith.constant 0 : index
    %0 = vector.load %arg0[%c0, %c0_0] : memref<32x128xbf16, #tpu.memory_space<vmem>>, vector<14x128xbf16>
    %c0_1 = arith.constant 0 : index
    %c0_2 = arith.constant 0 : index
    %1 = vector.load %arg10[%c0_1, %c0_2] : memref<32x384xbf16, #tpu.memory_space<vmem>>, vector<14x128xbf16>
    tpu.vector_store %arg10[%c0_1, %c0_2], %0 {strides = array<i32>} : memref<32x384xbf16, #tpu.memory_space<vmem>>, vector<14x128xbf16>,
    %c1 = arith.constant 1 : index
    %c0_3 = arith.constant 0 : index
    %2 = vector.load %arg0[%c1, %c0_3] : memref<32x128xbf16, #tpu.memory_space<vmem>>, vector<14x128xbf16>
    %c0_4 = arith.constant 0 : index
    %c128 = arith.constant 128 : index
    %3 = vector.load %arg10[%c0_4, %c128] : memref<32x384xbf16, #tpu.memory_space<vmem>>, vector<14x128xbf16>
    tpu.vector_store %arg10[%c0_4, %c128], %2 {strides = array<i32>} : memref<32x384xbf16, #tpu.memory_space<vmem>>, vector<14x128xbf16>,
    %c2 = arith.constant 2 : index
    %c0_5 = arith.constant 0 : index
    %4 = vector.load %arg0[%c2, %c0_5] : memref<32x128xbf16, #tpu.memory_space<vmem>>, vector<14x128xbf16>
    %c0_6 = arith.constant 0 : index
    %c256 = arith.constant 256 : index
    %5 = vector.load %arg10[%c0_6, %c256] : memref<32x384xbf16, #tpu.memory_space<vmem>>, vector<14x128xbf16>
    tpu.vector_store %arg10[%c0_6, %c256], %4 {strides = array<i32>} : memref<32x384xbf16, #tpu.memory_space<vmem>>, vector<14x128xbf16>,
    %c16 = arith.constant 16 : index
    %c0_7 = arith.constant 0 : index
    %6 = vector.load %arg0[%c16, %c0_7] : memref<32x128xbf16, #tpu.memory_space<vmem>>, vector<14x128xbf16>
    %c16_8 = arith.constant 16 : index
    %c0_9 = arith.constant 0 : index
    %7 = vector.load %arg10[%c16_8, %c0_9] : memref<32x384xbf16, #tpu.memory_space<vmem>>, vector<14x128xbf16>
    tpu.vector_store %arg10[%c16_8, %c0_9], %6 {strides = array<i32>} : memref<32x384xbf16, #tpu.memory_space<vmem>>, vector<14x128xbf16>,
    %c17 = arith.constant 17 : index
    %c0_10 = arith.constant 0 : index
    %8 = vector.load %arg0[%c17, %c0_10] : memref<32x128xbf16, #tpu.memory_space<vmem>>, vector<14x128xbf16>
    %c16_11 = arith.constant 16 : index
    %c128_12 = arith.constant 128 : index
    %9 = vector.load %arg10[%c16_11, %c128_12] : memref<32x384xbf16, #tpu.memory_space<vmem>>, vector<14x128xbf16>
    tpu.vector_store %arg10[%c16_11, %c128_12], %8 {strides = array<i32>} : memref<32x384xbf16, #tpu.memory_space<vmem>>, vector<14x128xbf16>,
    %c18 = arith.constant 18 : index
    %c0_13 = arith.constant 0 : index
    %10 = vector.load %arg0[%c18, %c0_13] : memref<32x128xbf16, #tpu.memory_space<vmem>>, vector<14x128xbf16>
    %c16_14 = arith.constant 16 : index
    %c256_15 = arith.constant 256 : index
    %11 = vector.load %arg10[%c16_14, %c256_15] : memref<32x384xbf16, #tpu.memory_space<vmem>>, vector<14x128xbf16>
    tpu.vector_store %arg10[%c16_14, %c256_15], %10 {strides = array<i32>} : memref<32x384xbf16, #tpu.memory_space<vmem>>, vector<14x128xbf16>,
    %c0_16 = arith.constant 0 : index
    %c0_17 = arith.constant 0 : index
    %12 = vector.load %arg10[%c0_16, %c0_17] : memref<32x384xbf16, #tpu.memory_space<vmem>>, vector<32x384xbf16>
    %c0_18 = arith.constant 0 : index
    %c0_19 = arith.constant 0 : index
    %13 = vector.load %arg1[%c0_18, %c0_19] : memref<384x128xbf16, #tpu.memory_space<vmem>>, vector<384x128xbf16>
    %cst = arith.constant dense<0.000000e+00> : vector<32x128xf32>
    %14 = tpu.matmul %12, %13, %cst {dimension_numbers = #tpu.dot_dimension_numbers<[1], [0], [0], [1], [0, 0, 1, 1], [], []>} : vector<32x384xbf16>, vector<384x128xbf16>, vector<32x128xf32> -> vector<32x128xf32>
    %c0_20 = arith.constant 0 : index
    %c0_21 = arith.constant 0 : index
    %15 = vector.load %arg2[%c0_20, %c0_21] : memref<1x128xf32, #tpu.memory_space<vmem>>, vector<1x128xf32>
    %16 = vector.broadcast %15 : vector<1x128xf32> to vector<32x128xf32>
    %17 = arith.addf %14, %16 : vector<32x128xf32>
    %cst_22 = arith.constant 0.000000e+00 : f32
    %18 = vector.broadcast %cst_22 : f32 to vector<32x128xf32>
    %19 = arith.maximumf %17, %18 : vector<32x128xf32>
    %c0_23 = arith.constant 0 : index
    %c0_24 = arith.constant 0 : index
    %20 = vector.load %arg11[%c0_23, %c0_24] : memref<32x128xf32, #tpu.memory_space<vmem>>, vector<32x128xf32>
    tpu.vector_store %arg11[%c0_23, %c0_24], %19 {strides = array<i32>} : memref<32x128xf32, #tpu.memory_space<vmem>>, vector<32x128xf32>,
    %c0_25 = arith.constant 0 : index
    %c0_26 = arith.constant 0 : index
    %21 = tpu.strided_load %arg11[%c0_25, %c0_26] {strides = array<i32: 2, 1>} : memref<32x128xf32, #tpu.memory_space<vmem>>, vector<6x128xf32>
    %22 = arith.truncf %21 : vector<6x128xf32> to vector<6x128xbf16>
    %c0_27 = arith.constant 0 : index
    %c0_28 = arith.constant 0 : index
    %23 = vector.load %arg12[%c0_27, %c0_28] : memref<16x384xbf16, #tpu.memory_space<vmem>>, vector<6x128xbf16>
    tpu.vector_store %arg12[%c0_27, %c0_28], %22 {strides = array<i32>} : memref<16x384xbf16, #tpu.memory_space<vmem>>, vector<6x128xbf16>,
    %c1_29 = arith.constant 1 : index
    %c0_30 = arith.constant 0 : index
    %24 = tpu.strided_load %arg11[%c1_29, %c0_30] {strides = array<i32: 2, 1>} : memref<32x128xf32, #tpu.memory_space<vmem>>, vector<6x128xf32>
    %25 = arith.truncf %24 : vector<6x128xf32> to vector<6x128xbf16>
    %c0_31 = arith.constant 0 : index
    %c128_32 = arith.constant 128 : index
    %26 = vector.load %arg12[%c0_31, %c128_32] : memref<16x384xbf16, #tpu.memory_space<vmem>>, vector<6x128xbf16>
    tpu.vector_store %arg12[%c0_31, %c128_32], %25 {strides = array<i32>} : memref<16x384xbf16, #tpu.memory_space<vmem>>, vector<6x128xbf16>,
    %c2_33 = arith.constant 2 : index
    %c0_34 = arith.constant 0 : index
    %27 = tpu.strided_load %arg11[%c2_33, %c0_34] {strides = array<i32: 2, 1>} : memref<32x128xf32, #tpu.memory_space<vmem>>, vector<6x128xf32>
    %28 = arith.truncf %27 : vector<6x128xf32> to vector<6x128xbf16>
    %c0_35 = arith.constant 0 : index
    %c256_36 = arith.constant 256 : index
    %29 = vector.load %arg12[%c0_35, %c256_36] : memref<16x384xbf16, #tpu.memory_space<vmem>>, vector<6x128xbf16>
    tpu.vector_store %arg12[%c0_35, %c256_36], %28 {strides = array<i32>} : memref<16x384xbf16, #tpu.memory_space<vmem>>, vector<6x128xbf16>,
    %c16_37 = arith.constant 16 : index
    %c0_38 = arith.constant 0 : index
    %30 = tpu.strided_load %arg11[%c16_37, %c0_38] {strides = array<i32: 2, 1>} : memref<32x128xf32, #tpu.memory_space<vmem>>, vector<6x128xf32>
    %31 = arith.truncf %30 : vector<6x128xf32> to vector<6x128xbf16>
    %c8 = arith.constant 8 : index
    %c0_39 = arith.constant 0 : index
    %32 = vector.load %arg12[%c8, %c0_39] : memref<16x384xbf16, #tpu.memory_space<vmem>>, vector<6x128xbf16>
    tpu.vector_store %arg12[%c8, %c0_39], %31 {strides = array<i32>} : memref<16x384xbf16, #tpu.memory_space<vmem>>, vector<6x128xbf16>,
    %c17_40 = arith.constant 17 : index
    %c0_41 = arith.constant 0 : index
    %33 = tpu.strided_load %arg11[%c17_40, %c0_41] {strides = array<i32: 2, 1>} : memref<32x128xf32, #tpu.memory_space<vmem>>, vector<6x128xf32>
    %34 = arith.truncf %33 : vector<6x128xf32> to vector<6x128xbf16>
    %c8_42 = arith.constant 8 : index
    %c128_43 = arith.constant 128 : index
    %35 = vector.load %arg12[%c8_42, %c128_43] : memref<16x384xbf16, #tpu.memory_space<vmem>>, vector<6x128xbf16>
    tpu.vector_store %arg12[%c8_42, %c128_43], %34 {strides = array<i32>} : memref<16x384xbf16, #tpu.memory_space<vmem>>, vector<6x128xbf16>,
    %c18_44 = arith.constant 18 : index
    %c0_45 = arith.constant 0 : index
    %36 = tpu.strided_load %arg11[%c18_44, %c0_45] {strides = array<i32: 2, 1>} : memref<32x128xf32, #tpu.memory_space<vmem>>, vector<6x128xf32>
    %37 = arith.truncf %36 : vector<6x128xf32> to vector<6x128xbf16>
    %c8_46 = arith.constant 8 : index
    %c256_47 = arith.constant 256 : index
    %38 = vector.load %arg12[%c8_46, %c256_47] : memref<16x384xbf16, #tpu.memory_space<vmem>>, vector<6x128xbf16>
    tpu.vector_store %arg12[%c8_46, %c256_47], %37 {strides = array<i32>} : memref<16x384xbf16, #tpu.memory_space<vmem>>, vector<6x128xbf16>,
    %c0_48 = arith.constant 0 : index
    %c0_49 = arith.constant 0 : index
    %39 = vector.load %arg12[%c0_48, %c0_49] : memref<16x384xbf16, #tpu.memory_space<vmem>>, vector<16x384xbf16>
    %c0_50 = arith.constant 0 : index
    %c0_51 = arith.constant 0 : index
    %40 = vector.load %arg3[%c0_50, %c0_51] : memref<384x128xbf16, #tpu.memory_space<vmem>>, vector<384x128xbf16>
    %cst_52 = arith.constant dense<0.000000e+00> : vector<16x128xf32>
    %41 = tpu.matmul %39, %40, %cst_52 {dimension_numbers = #tpu.dot_dimension_numbers<[1], [0], [0], [1], [0, 0, 1, 1], [], []>} : vector<16x384xbf16>, vector<384x128xbf16>, vector<16x128xf32> -> vector<16x128xf32>
    %c0_53 = arith.constant 0 : index
    %c0_54 = arith.constant 0 : index
    %42 = vector.load %arg4[%c0_53, %c0_54] : memref<1x128xf32, #tpu.memory_space<vmem>>, vector<1x128xf32>
    %43 = vector.broadcast %42 : vector<1x128xf32> to vector<16x128xf32>
    %44 = arith.addf %41, %43 : vector<16x128xf32>
    %cst_55 = arith.constant 0.000000e+00 : f32
    %45 = vector.broadcast %cst_55 : f32 to vector<16x128xf32>
    %46 = arith.maximumf %44, %45 : vector<16x128xf32>
    %c0_56 = arith.constant 0 : index
    %c0_57 = arith.constant 0 : index
    %47 = vector.load %arg13[%c0_56, %c0_57] : memref<16x128xf32, #tpu.memory_space<vmem>>, vector<16x128xf32>
    tpu.vector_store %arg13[%c0_56, %c0_57], %46 {strides = array<i32>} : memref<16x128xf32, #tpu.memory_space<vmem>>, vector<16x128xf32>,
    %c0_58 = arith.constant 0 : index
    %c0_59 = arith.constant 0 : index
    %48 = vector.load %arg13[%c0_58, %c0_59] : memref<16x128xf32, #tpu.memory_space<vmem>>, vector<1x128xf32>
    %49 = arith.truncf %48 : vector<1x128xf32> to vector<1x128xbf16>
    %c0_60 = arith.constant 0 : index
    %c0_61 = arith.constant 0 : index
    %50 = vector.load %arg14[%c0_60, %c0_61] : memref<2x768xbf16, #tpu.memory_space<vmem>>, vector<1x128xbf16>
    tpu.vector_store %arg14[%c0_60, %c0_61], %49 {strides = array<i32>} : memref<2x768xbf16, #tpu.memory_space<vmem>>, vector<1x128xbf16>,
    %c1_62 = arith.constant 1 : index
    %c0_63 = arith.constant 0 : index
    %51 = vector.load %arg13[%c1_62, %c0_63] : memref<16x128xf32, #tpu.memory_space<vmem>>, vector<1x128xf32>
    %52 = arith.truncf %51 : vector<1x128xf32> to vector<1x128xbf16>
    %c0_64 = arith.constant 0 : index
    %c128_65 = arith.constant 128 : index
    %53 = vector.load %arg14[%c0_64, %c128_65] : memref<2x768xbf16, #tpu.memory_space<vmem>>, vector<1x128xbf16>
    tpu.vector_store %arg14[%c0_64, %c128_65], %52 {strides = array<i32>} : memref<2x768xbf16, #tpu.memory_space<vmem>>, vector<1x128xbf16>,
    %c2_66 = arith.constant 2 : index
    %c0_67 = arith.constant 0 : index
    %54 = vector.load %arg13[%c2_66, %c0_67] : memref<16x128xf32, #tpu.memory_space<vmem>>, vector<1x128xf32>
    %55 = arith.truncf %54 : vector<1x128xf32> to vector<1x128xbf16>
    %c0_68 = arith.constant 0 : index
    %c256_69 = arith.constant 256 : index
    %56 = vector.load %arg14[%c0_68, %c256_69] : memref<2x768xbf16, #tpu.memory_space<vmem>>, vector<1x128xbf16>
    tpu.vector_store %arg14[%c0_68, %c256_69], %55 {strides = array<i32>} : memref<2x768xbf16, #tpu.memory_space<vmem>>, vector<1x128xbf16>,
    %c3 = arith.constant 3 : index
    %c0_70 = arith.constant 0 : index
    %57 = vector.load %arg13[%c3, %c0_70] : memref<16x128xf32, #tpu.memory_space<vmem>>, vector<1x128xf32>
    %58 = arith.truncf %57 : vector<1x128xf32> to vector<1x128xbf16>
    %c0_71 = arith.constant 0 : index
    %c384 = arith.constant 384 : index
    %59 = vector.load %arg14[%c0_71, %c384] : memref<2x768xbf16, #tpu.memory_space<vmem>>, vector<1x128xbf16>
    tpu.vector_store %arg14[%c0_71, %c384], %58 {strides = array<i32>} : memref<2x768xbf16, #tpu.memory_space<vmem>>, vector<1x128xbf16>,
    %c4 = arith.constant 4 : index
    %c0_72 = arith.constant 0 : index
    %60 = vector.load %arg13[%c4, %c0_72] : memref<16x128xf32, #tpu.memory_space<vmem>>, vector<1x128xf32>
    %61 = arith.truncf %60 : vector<1x128xf32> to vector<1x128xbf16>
    %c0_73 = arith.constant 0 : index
    %c512 = arith.constant 512 : index
    %62 = vector.load %arg14[%c0_73, %c512] : memref<2x768xbf16, #tpu.memory_space<vmem>>, vector<1x128xbf16>
    tpu.vector_store %arg14[%c0_73, %c512], %61 {strides = array<i32>} : memref<2x768xbf16, #tpu.memory_space<vmem>>, vector<1x128xbf16>,
    %c5 = arith.constant 5 : index
    %c0_74 = arith.constant 0 : index
    %63 = vector.load %arg13[%c5, %c0_74] : memref<16x128xf32, #tpu.memory_space<vmem>>, vector<1x128xf32>
    %64 = arith.truncf %63 : vector<1x128xf32> to vector<1x128xbf16>
    %c0_75 = arith.constant 0 : index
    %c640 = arith.constant 640 : index
    %65 = vector.load %arg14[%c0_75, %c640] : memref<2x768xbf16, #tpu.memory_space<vmem>>, vector<1x128xbf16>
    tpu.vector_store %arg14[%c0_75, %c640], %64 {strides = array<i32>} : memref<2x768xbf16, #tpu.memory_space<vmem>>, vector<1x128xbf16>,
    %c8_76 = arith.constant 8 : index
    %c0_77 = arith.constant 0 : index
    %66 = vector.load %arg13[%c8_76, %c0_77] : memref<16x128xf32, #tpu.memory_space<vmem>>, vector<1x128xf32>
    %67 = arith.truncf %66 : vector<1x128xf32> to vector<1x128xbf16>
    %c1_78 = arith.constant 1 : index
    %c0_79 = arith.constant 0 : index
    %68 = vector.load %arg14[%c1_78, %c0_79] : memref<2x768xbf16, #tpu.memory_space<vmem>>, vector<1x128xbf16>
    tpu.vector_store %arg14[%c1_78, %c0_79], %67 {strides = array<i32>} : memref<2x768xbf16, #tpu.memory_space<vmem>>, vector<1x128xbf16>,
    %c9 = arith.constant 9 : index
    %c0_80 = arith.constant 0 : index
    %69 = vector.load %arg13[%c9, %c0_80] : memref<16x128xf32, #tpu.memory_space<vmem>>, vector<1x128xf32>
    %70 = arith.truncf %69 : vector<1x128xf32> to vector<1x128xbf16>
    %c1_81 = arith.constant 1 : index
    %c128_82 = arith.constant 128 : index
    %71 = vector.load %arg14[%c1_81, %c128_82] : memref<2x768xbf16, #tpu.memory_space<vmem>>, vector<1x128xbf16>
    tpu.vector_store %arg14[%c1_81, %c128_82], %70 {strides = array<i32>} : memref<2x768xbf16, #tpu.memory_space<vmem>>, vector<1x128xbf16>,
    %c10 = arith.constant 10 : index
    %c0_83 = arith.constant 0 : index
    %72 = vector.load %arg13[%c10, %c0_83] : memref<16x128xf32, #tpu.memory_space<vmem>>, vector<1x128xf32>
    %73 = arith.truncf %72 : vector<1x128xf32> to vector<1x128xbf16>
    %c1_84 = arith.constant 1 : index
    %c256_85 = arith.constant 256 : index
    %74 = vector.load %arg14[%c1_84, %c256_85] : memref<2x768xbf16, #tpu.memory_space<vmem>>, vector<1x128xbf16>
    tpu.vector_store %arg14[%c1_84, %c256_85], %73 {strides = array<i32>} : memref<2x768xbf16, #tpu.memory_space<vmem>>, vector<1x128xbf16>,
    %c11 = arith.constant 11 : index
    %c0_86 = arith.constant 0 : index
    %75 = vector.load %arg13[%c11, %c0_86] : memref<16x128xf32, #tpu.memory_space<vmem>>, vector<1x128xf32>
    %76 = arith.truncf %75 : vector<1x128xf32> to vector<1x128xbf16>
    %c1_87 = arith.constant 1 : index
    %c384_88 = arith.constant 384 : index
    %77 = vector.load %arg14[%c1_87, %c384_88] : memref<2x768xbf16, #tpu.memory_space<vmem>>, vector<1x128xbf16>
    tpu.vector_store %arg14[%c1_87, %c384_88], %76 {strides = array<i32>} : memref<2x768xbf16, #tpu.memory_space<vmem>>, vector<1x128xbf16>,
    %c12 = arith.constant 12 : index
    %c0_89 = arith.constant 0 : index
    %78 = vector.load %arg13[%c12, %c0_89] : memref<16x128xf32, #tpu.memory_space<vmem>>, vector<1x128xf32>
    %79 = arith.truncf %78 : vector<1x128xf32> to vector<1x128xbf16>
    %c1_90 = arith.constant 1 : index
    %c512_91 = arith.constant 512 : index
    %80 = vector.load %arg14[%c1_90, %c512_91] : memref<2x768xbf16, #tpu.memory_space<vmem>>, vector<1x128xbf16>
    tpu.vector_store %arg14[%c1_90, %c512_91], %79 {strides = array<i32>} : memref<2x768xbf16, #tpu.memory_space<vmem>>, vector<1x128xbf16>,
    %c13 = arith.constant 13 : index
    %c0_92 = arith.constant 0 : index
    %81 = vector.load %arg13[%c13, %c0_92] : memref<16x128xf32, #tpu.memory_space<vmem>>, vector<1x128xf32>
    %82 = arith.truncf %81 : vector<1x128xf32> to vector<1x128xbf16>
    %c1_93 = arith.constant 1 : index
    %c640_94 = arith.constant 640 : index
    %83 = vector.load %arg14[%c1_93, %c640_94] : memref<2x768xbf16, #tpu.memory_space<vmem>>, vector<1x128xbf16>
    tpu.vector_store %arg14[%c1_93, %c640_94], %82 {strides = array<i32>} : memref<2x768xbf16, #tpu.memory_space<vmem>>, vector<1x128xbf16>,
    %c0_95 = arith.constant 0 : index
    %c0_96 = arith.constant 0 : index
    %84 = vector.load %arg14[%c0_95, %c0_96] : memref<2x768xbf16, #tpu.memory_space<vmem>>, vector<2x768xbf16>
    %c0_97 = arith.constant 0 : index
    %c0_98 = arith.constant 0 : index
    %85 = vector.load %arg5[%c0_97, %c0_98] : memref<768x32xbf16, #tpu.memory_space<vmem>>, vector<768x32xbf16>
    %cst_99 = arith.constant dense<0.000000e+00> : vector<2x32xf32>
    %86 = tpu.matmul %84, %85, %cst_99 {dimension_numbers = #tpu.dot_dimension_numbers<[1], [0], [0], [1], [0, 0, 1, 1], [], []>} : vector<2x768xbf16>, vector<768x32xbf16>, vector<2x32xf32> -> vector<2x32xf32>
    %c0_100 = arith.constant 0 : index
    %c0_101 = arith.constant 0 : index
    %87 = vector.load %arg6[%c0_100, %c0_101] : memref<1x32xf32, #tpu.memory_space<vmem>>, vector<1x32xf32>
    %88 = vector.broadcast %87 : vector<1x32xf32> to vector<2x32xf32>
    %89 = arith.addf %86, %88 : vector<2x32xf32>
    %cst_102 = arith.constant 0.000000e+00 : f32
    %90 = vector.broadcast %cst_102 : f32 to vector<2x32xf32>
    %91 = arith.maximumf %89, %90 : vector<2x32xf32>
    %92 = arith.truncf %91 : vector<2x32xf32> to vector<2x32xbf16>
    %c0_103 = arith.constant 0 : index
    %c0_104 = arith.constant 0 : index
    %93 = vector.load %arg7[%c0_103, %c0_104] : memref<32x128xbf16, #tpu.memory_space<vmem>>, vector<32x128xbf16>
    %cst_105 = arith.constant dense<0.000000e+00> : vector<2x128xf32>
    %94 = tpu.matmul %92, %93, %cst_105 {dimension_numbers = #tpu.dot_dimension_numbers<[1], [0], [0], [1], [0, 0, 1, 1], [], []>} : vector<2x32xbf16>, vector<32x128xbf16>, vector<2x128xf32> -> vector<2x128xf32>
    %c0_106 = arith.constant 0 : index
    %c0_107 = arith.constant 0 : index
    %95 = vector.load %arg8[%c0_106, %c0_107] : memref<1x128xf32, #tpu.memory_space<vmem>>, vector<1x128xf32>
    %96 = vector.broadcast %95 : vector<1x128xf32> to vector<2x128xf32>
    %97 = arith.addf %94, %96 : vector<2x128xf32>
    %c0_108 = arith.constant 0 : index
    %c0_109 = arith.constant 0 : index
    %98 = vector.load %arg9[%c0_108, %c0_109] : memref<2x128xf32, #tpu.memory_space<vmem>>, vector<2x128xf32>
    tpu.vector_store %arg9[%c0_108, %c0_109], %97 {strides = array<i32>} : memref<2x128xf32, #tpu.memory_space<vmem>>, vector<2x128xf32>,
    return
  }
}

</mosaic_0001>

<llo_original>
// kernel: convnet_forward.1
$region0: #{convnet_forward.1}
  #allocation0 [shape = 'u32[]', space=smem, size = 0x4, offset = 0x4, fixed_abs, tag = 'smem constant byte address 0x4 - core index']
  #allocation1 [shape = 'u32[144,128]{1,0:T(1,128)}', space=vmem, size = 0x12000, scoped, tag = 'internal scratch']
  #allocation2 [shape = 'bf16[32,384]{1,0:T(8,128)(2,1)}', space=vmem, size = 0x6000, scoped, tag = 'scratch operand']
  #allocation3 [shape = 'f32[32,128]{1,0:T(8,128)}', space=vmem, size = 0x4000, scoped, tag = 'scratch operand']
  #allocation4 [shape = 'bf16[16,384]{1,0:T(8,128)(2,1)}', space=vmem, size = 0x3000, scoped, tag = 'scratch operand']
  #allocation5 [shape = 'f32[16,128]{1,0:T(8,128)}', space=vmem, size = 0x2000, scoped, tag = 'scratch operand']
  #allocation6 [shape = 'bf16[2,768]{1,0:T(2,128)(2,1)}', space=vmem, size = 0xc00, scoped, tag = 'scratch operand']
  %s0 = inlined_call_operand.vmem [shape: bf16[32,128], index: 0, kind: input, shape index: {}]
  %s1 = inlined_call_operand.vmem [shape: bf16[384,128], index: 1, kind: input, shape index: {}]
  %s2 = inlined_call_operand.vmem [shape: f32[1,128], index: 2, kind: input, shape index: {}]
  %s3 = inlined_call_operand.vmem [shape: bf16[384,128], index: 3, kind: input, shape index: {}]
  %s4 = inlined_call_operand.vmem [shape: f32[1,128], index: 4, kind: input, shape index: {}]
  %s5 = inlined_call_operand.vmem [shape: bf16[768,32], index: 5, kind: input, shape index: {}]
  %s6 = inlined_call_operand.vmem [shape: f32[1,32], index: 6, kind: input, shape index: {}]
  %s7 = inlined_call_operand.vmem [shape: bf16[32,128], index: 7, kind: input, shape index: {}]
  %s8 = inlined_call_operand.vmem [shape: f32[1,128], index: 8, kind: input, shape index: {}]
  %s9 = inlined_call_operand.hbm [shape: f32[2,128], index: 9, kind: output, shape index: {}]
  %s10 = sld [smem:[#allocation0]]
  $region46: #{convnet_forward.1} parent=0
    _
  %s12 = ssub.s32 1, %s10
  %s13 = scalar_select 0, %s12, %s10
  $region1: #{convnet_forward.1} parent=0
    #allocation7 [shape = 'u8[1024]{0}', space=vmem, size = 0x400, scoped, tag = 'output window, operand 0, single buffered']
    #allocation8 [shape = 's32[1]{0}', space=sflag, size = 0x4, scoped, tag = 'scoped memory for convnet_forward.1']
    %14 = vsyncpa [#allocation8], 0
    // Predicated region
    $region2: #{convnet_forward.1} parent=1 // pred_check
      _
    $region3: #{convnet_forward.1} parent=1 // pred_check_branch
      %16 = sbr.rel (0) target = $region5
    $region4: #{convnet_forward.1} parent=1 // pred_region
      _
    $region5: #{convnet_forward.1} parent=1 // pred_fallthru
      _
    // Predicated region
    $region6: #{convnet_forward.1} parent=1 // pred_check
      _
    $region7: #{convnet_forward.1} parent=1 // pred_check_branch
      %18 = sbr.rel (0) target = $region9
    $region8: #{convnet_forward.1} parent=1 // pred_region
      _
    $region9: #{convnet_forward.1} parent=1 // pred_fallthru
      _
    // Predicated region
    $region10: #{convnet_forward.1} parent=1 // pred_check
      _
    $region11: #{convnet_forward.1} parent=1 // pred_check_branch
      %20 = sbr.rel (0) target = $region13
    $region12: #{convnet_forward.1} parent=1 // pred_region
      _
    $region13: #{convnet_forward.1} parent=1 // pred_fallthru
      _
    // Predicated region
    $region14: #{convnet_forward.1} parent=1 // pred_check
      _
    $region15: #{convnet_forward.1} parent=1 // pred_check_branch
      %22 = sbr.rel (0) target = $region17
    $region16: #{convnet_forward.1} parent=1 // pred_region
      _
    $region17: #{convnet_forward.1} parent=1 // pred_fallthru
      _
    // Predicated region
    $region18: #{convnet_forward.1} parent=1 // pred_check
      _
    $region19: #{convnet_forward.1} parent=1 // pred_check_branch
      %24 = sbr.rel (0) target = $region21
    $region20: #{convnet_forward.1} parent=1 // pred_region
      _
    $region21: #{convnet_forward.1} parent=1 // pred_fallthru
      _
    // Predicated region
    $region22: #{convnet_forward.1} parent=1 // pred_check
      _
    $region23: #{convnet_forward.1} parent=1 // pred_check_branch
      %26 = sbr.rel (0) target = $region25
    $region24: #{convnet_forward.1} parent=1 // pred_region
      _
    $region25: #{convnet_forward.1} parent=1 // pred_fallthru
      _
    // Predicated region
    $region26: #{convnet_forward.1} parent=1 // pred_check
      _
    $region27: #{convnet_forward.1} parent=1 // pred_check_branch
      %28 = sbr.rel (0) target = $region29
    $region28: #{convnet_forward.1} parent=1 // pred_region
      _
    $region29: #{convnet_forward.1} parent=1 // pred_fallthru
      _
    // Predicated region
    $region30: #{convnet_forward.1} parent=1 // pred_check
      _
    $region31: #{convnet_forward.1} parent=1 // pred_check_branch
      %30 = sbr.rel (0) target = $region33
    $region32: #{convnet_forward.1} parent=1 // pred_region
      _
    $region33: #{convnet_forward.1} parent=1 // pred_fallthru
      _
    // Predicated region
    $region34: #{convnet_forward.1} parent=1 // pred_check
      _
    $region35: #{convnet_forward.1} parent=1 // pred_check_branch
      %32 = sbr.rel (0) target = $region37
    $region36: #{convnet_forward.1} parent=1 // pred_region
      _
    $region37: #{convnet_forward.1} parent=1 // pred_fallthru
      _
    %v34 = vld [vmem:[%s0] sm:$0xf]
    %v35 = vld [vmem:[%s0 + $0x4] sm:$0x7]
    %36 = vst [vmem:[#allocation2] sm:$0xf] %v34
    %37 = vst [vmem:[#allocation2 + $0xc] sm:$0x7] %v35
    %v38 = vld [vmem:[%s0] sm:$0xf]
    %v39 = vld [vmem:[%s0 + $0x4] sm:$0xf]
    %vm40 = vsmask.f32 3328
    %vm41 = vsmask.f32 7440
    %vm42 = vmor %vm40, %vm41
    %v44 = vshrl.u32 %v38, 16
    %v46 = vrot.slane %v44, 4
    %v47 = vshll.u32 %v38, 16
    %v49 = vrot.slane %v47, 5
    %v50 = vor.u32 %v46, %v49
    %v51 = vrot.slane %v50, 4
    %v53 = vshll.u32 %v39, 16
    %v55 = vrot.slane %v53, 5
    %v56 = vsel %vm42, %v51, %v55
    %v57 = vshrl.u32 %v39, 16
    %v59 = vrot.slane %v57, 4
    %v60 = vor.u32 %v59, %v55
    %v61 = vrot.slane %v60, 4
    %64 = vst [vmem:[#allocation2 + $0x4] sm:$0xf] %v56
    %65 = vst [vmem:[#allocation2 + $0x10] sm:$0x7] %v61
    %v66 = vld [vmem:[%s0] sm:$0xe]
    %v67 = vld [vmem:[%s0 + $0x4] sm:$0xf]
    %vm70 = vcmask 1042432
    %vm71 = vcmask 1046532
    %vm72 = vmor %vm70, %vm71
    %v73 = vrot.slane %v66, 5
    %v74 = vrot.slane %v73, 4
    %v75 = vrot.slane %v67, 5
    %v76 = vsel %vm72, %v74, %v75
    %v77 = vrot.slane %v75, 4
    %80 = vst [vmem:[#allocation2 + $0x8] sm:$0xf] %v76
    %81 = vst [vmem:[#allocation2 + $0x14] sm:$0x7] %v77
    %v82 = vld [vmem:[%s0 + $0x8] sm:$0xf]
    %v83 = vld [vmem:[%s0 + $0xc] sm:$0x7]
    %84 = vst [vmem:[#allocation2 + $0x18] sm:$0xf] %v82
    %85 = vst [vmem:[#allocation2 + $0x24] sm:$0x7] %v83
    %v86 = vld [vmem:[%s0 + $0x8] sm:$0xf]
    %v87 = vld [vmem:[%s0 + $0xc] sm:$0xf]
    %v89 = vshrl.u32 %v86, 16
    %v91 = vrot.slane %v89, 4
    %v92 = vshll.u32 %v86, 16
    %v94 = vrot.slane %v92, 5
    %v95 = vor.u32 %v91, %v94
    %v96 = vrot.slane %v95, 4
    %v98 = vshll.u32 %v87, 16
    %v100 = vrot.slane %v98, 5
    %v101 = vsel %vm42, %v96, %v100
    %v102 = vshrl.u32 %v87, 16
    %v104 = vrot.slane %v102, 4
    %v105 = vor.u32 %v104, %v100
    %v106 = vrot.slane %v105, 4
    %109 = vst [vmem:[#allocation2 + $0x1c] sm:$0xf] %v101
    %110 = vst [vmem:[#allocation2 + $0x28] sm:$0x7] %v106
    %v111 = vld [vmem:[%s0 + $0x8] sm:$0xe]
    %v112 = vld [vmem:[%s0 + $0xc] sm:$0xf]
    %v115 = vrot.slane %v111, 5
    %v116 = vrot.slane %v115, 4
    %v117 = vrot.slane %v112, 5
    %v118 = vsel %vm72, %v116, %v117
    %v119 = vrot.slane %v117, 4
    %122 = vst [vmem:[#allocation2 + $0x20] sm:$0xf] %v118
    %123 = vst [vmem:[#allocation2 + $0x2c] sm:$0x7] %v119
    %v124 = vld [vmem:[#allocation2] sm:$0xff]
    %v125 = vld [vmem:[#allocation2 + $0x8] sm:$0xf]
    %v126 = vld [vmem:[#allocation2 + $0xc] sm:$0xff]
    %v127 = vld [vmem:[#allocation2 + $0x14] sm:$0xf]
    %v128 = vld [vmem:[#allocation2 + $0x18] sm:$0xff]
    %v129 = vld [vmem:[#allocation2 + $0x20] sm:$0xf]
    %v130 = vld [vmem:[#allocation2 + $0x24] sm:$0xff]
    %v131 = vld [vmem:[#allocation2 + $0x2c] sm:$0xf]
    %v132 = vld [vmem:[%s1] sm:$0xf]
    %v133 = vld [vmem:[%s1 + $0x4] sm:$0xf]
    %v134 = vld [vmem:[%s1 + $0x8] sm:$0xf]
    %v135 = vld [vmem:[%s1 + $0xc] sm:$0xf]
    %v136 = vld [vmem:[%s1 + $0x10] sm:$0xf]
    %v137 = vld [vmem:[%s1 + $0x14] sm:$0xf]
    %v138 = vld [vmem:[%s1 + $0x18] sm:$0xf]
    %v139 = vld [vmem:[%s1 + $0x1c] sm:$0xf]
    %v140 = vld [vmem:[%s1 + $0x20] sm:$0xf]
    %v141 = vld [vmem:[%s1 + $0x24] sm:$0xf]
    %v142 = vld [vmem:[%s1 + $0x28] sm:$0xf]
    %v143 = vld [vmem:[%s1 + $0x2c] sm:$0xf]
    %v144 = vld [vmem:[%s1 + $0x30] sm:$0xf]
    %v145 = vld [vmem:[%s1 + $0x34] sm:$0xf]
    %v146 = vld [vmem:[%s1 + $0x38] sm:$0xf]
    %v147 = vld [vmem:[%s1 + $0x3c] sm:$0xf]
    %v148 = vld [vmem:[%s1 + $0x40] sm:$0xf]
    %v149 = vld [vmem:[%s1 + $0x44] sm:$0xf]
    %v150 = vld [vmem:[%s1 + $0x48] sm:$0xf]
    %v151 = vld [vmem:[%s1 + $0x4c] sm:$0xf]
    %v152 = vld [vmem:[%s1 + $0x50] sm:$0xf]
    %v153 = vld [vmem:[%s1 + $0x54] sm:$0xf]
    %v154 = vld [vmem:[%s1 + $0x58] sm:$0xf]
    %v155 = vld [vmem:[%s1 + $0x5c] sm:$0xf]
    %v156 = vld [vmem:[%s1 + $0x60] sm:$0xf]
    %v157 = vld [vmem:[%s1 + $0x64] sm:$0xf]
    %v158 = vld [vmem:[%s1 + $0x68] sm:$0xf]
    %v159 = vld [vmem:[%s1 + $0x6c] sm:$0xf]
    %v160 = vld [vmem:[%s1 + $0x70] sm:$0xf]
    %v161 = vld [vmem:[%s1 + $0x74] sm:$0xf]
    %v162 = vld [vmem:[%s1 + $0x78] sm:$0xf]
    %v163 = vld [vmem:[%s1 + $0x7c] sm:$0xf]
    %v164 = vld [vmem:[%s1 + $0x80] sm:$0xf]
    %v165 = vld [vmem:[%s1 + $0x84] sm:$0xf]
    %v166 = vld [vmem:[%s1 + $0x88] sm:$0xf]
    %v167 = vld [vmem:[%s1 + $0x8c] sm:$0xf]
    %v168 = vld [vmem:[%s1 + $0x90] sm:$0xf]
    %v169 = vld [vmem:[%s1 + $0x94] sm:$0xf]
    %v170 = vld [vmem:[%s1 + $0x98] sm:$0xf]
    %v171 = vld [vmem:[%s1 + $0x9c] sm:$0xf]
    %v172 = vld [vmem:[%s1 + $0xa0] sm:$0xf]
    %v173 = vld [vmem:[%s1 + $0xa4] sm:$0xf]
    %v174 = vld [vmem:[%s1 + $0xa8] sm:$0xf]
    %v175 = vld [vmem:[%s1 + $0xac] sm:$0xf]
    %v176 = vld [vmem:[%s1 + $0xb0] sm:$0xf]
    %v177 = vld [vmem:[%s1 + $0xb4] sm:$0xf]
    %v178 = vld [vmem:[%s1 + $0xb8] sm:$0xf]
    %v179 = vld [vmem:[%s1 + $0xbc] sm:$0xf]
    %v180 = vld [vmem:[%s2] sm:$0x1]
    %v182 = vlaneseq
    %v183 = vshrl.u32 %v182, 7
    %v184 = vsub.s32 0, %v183
    %v185 = vrot.slane %v180, %v184
    %v195 = vunpack.c.l.b16 %v124
    %v196 = vunpack.c.h.b16 %v124
    %v197 = vunpack.c.l.b16 %v125
    %v198 = vunpack.c.l.b16 %v126
    %v199 = vunpack.c.h.b16 %v126
    %v200 = vunpack.c.l.b16 %v127
    %v201 = vunpack.c.l.b16 %v128
    %v202 = vunpack.c.h.b16 %v128
    %v203 = vunpack.c.l.b16 %v129
    %v204 = vunpack.c.l.b16 %v130
    %v205 = vunpack.c.h.b16 %v130
    %v206 = vunpack.c.l.b16 %v131
    %v207 = vpack.c.b16 %v198, %v195
    %v208 = vpack.c.b16 %v199, %v196
    %v209 = vpack.c.b16 %v200, %v197
    %v210 = vpack.c.b16 %v204, %v201
    %v211 = vpack.c.b16 %v205, %v202
    %v212 = vpack.c.b16 %v206, %v203
    %v267 = vunpack.c.l.b16 %v132
    %v268 = vunpack.c.l.b16 %v133
    %v269 = vunpack.c.l.b16 %v134
    %v270 = vunpack.c.l.b16 %v135
    %v271 = vunpack.c.l.b16 %v136
    %v272 = vunpack.c.l.b16 %v137
    %v273 = vunpack.c.l.b16 %v138
    %v274 = vunpack.c.l.b16 %v139
    %v275 = vunpack.c.l.b16 %v140
    %v276 = vunpack.c.l.b16 %v141
    %v277 = vunpack.c.l.b16 %v142
    %v278 = vunpack.c.l.b16 %v143
    %v279 = vunpack.c.l.b16 %v144
    %v280 = vunpack.c.l.b16 %v145
    %v281 = vunpack.c.l.b16 %v146
    %v282 = vunpack.c.l.b16 %v147
    %v283 = vunpack.c.l.b16 %v148
    %v284 = vunpack.c.l.b16 %v149
    %v285 = vunpack.c.l.b16 %v150
    %v286 = vunpack.c.l.b16 %v151
    %v287 = vunpack.c.l.b16 %v152
    %v288 = vunpack.c.l.b16 %v153
    %v289 = vunpack.c.l.b16 %v154
    %v290 = vunpack.c.l.b16 %v155
    %v291 = vunpack.c.l.b16 %v156
    %v292 = vunpack.c.l.b16 %v157
    %v293 = vunpack.c.l.b16 %v158
    %v294 = vunpack.c.l.b16 %v159
    %v295 = vunpack.c.l.b16 %v160
    %v296 = vunpack.c.l.b16 %v161
    %v297 = vunpack.c.l.b16 %v162
    %v298 = vunpack.c.l.b16 %v163
    %v299 = vunpack.c.l.b16 %v164
    %v300 = vunpack.c.l.b16 %v165
    %v301 = vunpack.c.l.b16 %v166
    %v302 = vunpack.c.l.b16 %v167
    %v303 = vunpack.c.l.b16 %v168
    %v304 = vunpack.c.l.b16 %v169
    %v305 = vunpack.c.l.b16 %v170
    %v306 = vunpack.c.l.b16 %v171
    %v307 = vunpack.c.l.b16 %v172
    %v308 = vunpack.c.l.b16 %v173
    %v309 = vunpack.c.l.b16 %v174
    %v310 = vunpack.c.l.b16 %v175
    %v311 = vunpack.c.l.b16 %v176
    %v312 = vunpack.c.l.b16 %v177
    %v313 = vunpack.c.l.b16 %v178
    %v314 = vunpack.c.l.b16 %v179
    %v315 = vpack.c.b16 %v268, %v267
    %v316 = vpack.c.b16 %v270, %v269
    %v317 = vpack.c.b16 %v272, %v271
    %v318 = vpack.c.b16 %v274, %v273
    %v319 = vpack.c.b16 %v276, %v275
    %v320 = vpack.c.b16 %v278, %v277
    %v321 = vpack.c.b16 %v280, %v279
    %v322 = vpack.c.b16 %v282, %v281
    %v323 = vpack.c.b16 %v284, %v283
    %v324 = vpack.c.b16 %v286, %v285
    %v325 = vpack.c.b16 %v288, %v287
    %v326 = vpack.c.b16 %v290, %v289
    %v327 = vpack.c.b16 %v292, %v291
    %v328 = vpack.c.b16 %v294, %v293
    %v329 = vpack.c.b16 %v296, %v295
    %v330 = vpack.c.b16 %v298, %v297
    %v331 = vpack.c.b16 %v300, %v299
    %v332 = vpack.c.b16 %v302, %v301
    %v333 = vpack.c.b16 %v304, %v303
    %v334 = vpack.c.b16 %v306, %v305
    %v335 = vpack.c.b16 %v308, %v307
    %v336 = vpack.c.b16 %v310, %v309
    %v337 = vpack.c.b16 %v312, %v311
    %v338 = vpack.c.b16 %v314, %v313
    %363 = vmatprep.subr.bf16.mxu0 0
    %364 = vmatpush1.bf16.msra.mxu0 %v322
    %365 = vmatprep.subr.bf16.mxu0 0
    %366 = vmatpush1.bf16.msra.mxu0 %v321
    %367 = vmatprep.subr.bf16.mxu0 0
    %368 = vmatpush1.bf16.msra.mxu0 %v320
    %369 = vmatprep.subr.bf16.mxu0 0
    %370 = vmatpush1.bf16.msra.mxu0 %v319
    %371 = vmatprep.subr.bf16.mxu0 0
    %372 = vmatpush1.bf16.msra.mxu0 %v318
    %373 = vmatprep.subr.bf16.mxu0 0
    %374 = vmatpush1.bf16.msra.mxu0 %v317
    %375 = vmatprep.subr.bf16.mxu0 0
    %376 = vmatpush1.bf16.msra.mxu0 %v316
    %377 = vmatprep.subr.bf16.mxu0 0
    %378 = vmatpush1.bf16.msra.mxu0 %v315
    %379 = vmatprep.subr.bf16.mxu0 0
    %380 = vmatpush2.bf16.msra.mxu0 %v330
    %381 = vmatprep.subr.bf16.mxu0 0
    %382 = vmatpush2.bf16.msra.mxu0 %v329
    %383 = vmatprep.subr.bf16.mxu0 0
    %384 = vmatpush2.bf16.msra.mxu0 %v328
    %385 = vmatprep.subr.bf16.mxu0 0
    %386 = vmatpush2.bf16.msra.mxu0 %v327
    %387 = vmatprep.subr.bf16.mxu0 0
    %388 = vmatpush2.bf16.msra.mxu0 %v326
    %389 = vmatprep.subr.bf16.mxu0 0
    %390 = vmatpush2.bf16.msra.mxu0 %v325
    %391 = vmatprep.subr.bf16.mxu0 0
    %392 = vmatpush2.bf16.msra.mxu0 %v324
    %393 = vmatprep.subr.bf16.mxu0 0
    %394 = vmatpush2.bf16.msra.mxu0 %v323
    %395 = vmatprep.mubr.bf16.mxu0 %v208
    %396 = vmatmul.mubr.bf16.gmra.mxu0 %v207
    %v397 = vpop.f32.mrf.mxu0
    %v398 = vadd.f32 %v185, %v397
    %v399 = vpop.f32.mrf.mxu0
    %v400 = vpop.f32.mrf.mxu0
    %v401 = vadd.f32 %v185, %v400
    %v402 = vpop.f32.mrf.mxu0
    %403 = vmatprep.mubr.bf16.mxu0 %v211
    %404 = vmatmul.mubr.bf16.gmra.mxu0 %v210
    %v405 = vpop.f32.mrf.mxu0
    %v406 = vadd.f32 %v185, %v405
    %v407 = vpop.f32.mrf.mxu0
    %v408 = vpop.f32.mrf.mxu0
    %v409 = vadd.f32 %v185, %v408
    %v410 = vpop.f32.mrf.mxu0
    %411 = vdwg.mxu0
    %412 = vmatprep.subr.bf16.mxu0 0
    %413 = vmatpush1.bf16.msra.mxu0 %v338
    %414 = vmatprep.subr.bf16.mxu0 0
    %415 = vmatpush1.bf16.msra.mxu0 %v337
    %416 = vmatprep.subr.bf16.mxu0 0
    %417 = vmatpush1.bf16.msra.mxu0 %v336
    %418 = vmatprep.subr.bf16.mxu0 0
    %419 = vmatpush1.bf16.msra.mxu0 %v335
    %420 = vmatprep.subr.bf16.mxu0 0
    %421 = vmatpush1.bf16.msra.mxu0 %v334
    %422 = vmatprep.subr.bf16.mxu0 0
    %423 = vmatpush1.bf16.msra.mxu0 %v333
    %424 = vmatprep.subr.bf16.mxu0 0
    %425 = vmatpush1.bf16.msra.mxu0 %v332
    %426 = vmatprep.subr.bf16.mxu0 0
    %427 = vmatpush1.bf16.msra.mxu0 %v331
    %428 = vmatprep.subr.bf16.mxu0 0
    %429 = vmatpush2.bf16.msra.mxu0 0
    %430 = vmatprep.subr.bf16.mxu0 0
    %431 = vmatpush2.bf16.msra.mxu0 0
    %432 = vmatprep.subr.bf16.mxu0 0
    %433 = vmatpush2.bf16.msra.mxu0 0
    %434 = vmatprep.subr.bf16.mxu0 0
    %435 = vmatpush2.bf16.msra.mxu0 0
    %436 = vmatprep.subr.bf16.mxu0 0
    %437 = vmatpush2.bf16.msra.mxu0 0
    %438 = vmatprep.subr.bf16.mxu0 0
    %439 = vmatpush2.bf16.msra.mxu0 0
    %440 = vmatprep.subr.bf16.mxu0 0
    %441 = vmatpush2.bf16.msra.mxu0 0
    %442 = vmatprep.subr.bf16.mxu0 0
    %443 = vmatpush2.bf16.msra.mxu0 0
    %444 = vmatprep.mubr.bf16.mxu0 0
    %445 = vmatmul.mubr.bf16.gmra.mxu0 %v209
    %v446 = vpop.f32.mrf.mxu0
    %v447 = vadd.f32 %v398, %v446
    %v448 = vpop.f32.mrf.mxu0
    %v449 = vpop.f32.mrf.mxu0
    %v450 = vadd.f32 %v401, %v449
    %v451 = vpop.f32.mrf.mxu0
    %452 = vmatprep.mubr.bf16.mxu0 0
    %453 = vmatmul.mubr.bf16.gmra.mxu0 %v212
    %v454 = vpop.f32.mrf.mxu0
    %v455 = vadd.f32 %v406, %v454
    %v456 = vpop.f32.mrf.mxu0
    %v457 = vpop.f32.mrf.mxu0
    %v458 = vadd.f32 %v409, %v457
    %v459 = vpop.f32.mrf.mxu0
    %460 = vdwg.mxu0
    %v461 = vmax.f32 %v447, 0.0
    %v462 = vmax.f32 %v450, 0.0
    %v463 = vmax.f32 %v455, 0.0
    %v464 = vmax.f32 %v458, 0.0
    %465 = vst [vmem:[#allocation3] sm:$0xff] %v461
    %466 = vst [vmem:[#allocation3 + $0x8] sm:$0xff] %v462
    %467 = vst [vmem:[#allocation3 + $0x10] sm:$0xff] %v463
    %468 = vst [vmem:[#allocation3 + $0x18] sm:$0xff] %v464
    %v469 = vld [vmem:[#allocation3] ss:$2 sm:$0x3f]
    %v470 = vpack.c.bf16 %v469, %v469
    %471 = vst [vmem:[#allocation4] sm:$0x7] %v470
    %s472 = scalar_lea.vmem [#allocation3], 1
    %v473 = vld [vmem:[%s472] ss:$2 sm:$0x3f]
    %v474 = vpack.c.bf16 %v473, %v473
    %475 = vst [vmem:[#allocation4 + $0x4] sm:$0x7] %v474
    %s476 = scalar_lea.vmem [#allocation3], 2
    %v477 = vld [vmem:[%s476] ss:$2 sm:$0x3f]
    %v478 = vpack.c.bf16 %v477, %v477
    %479 = vst [vmem:[#allocation4 + $0x8] sm:$0x7] %v478
    %s480 = scalar_lea.vmem [#allocation3], 16
    %v481 = vld [vmem:[%s480] ss:$2 sm:$0x3f]
    %v482 = vpack.c.bf16 %v481, %v481
    %483 = vst [vmem:[#allocation4 + $0xc] sm:$0x7] %v482
    %s484 = scalar_lea.vmem [#allocation3], 17
    %v485 = vld [vmem:[%s484] ss:$2 sm:$0x3f]
    %v486 = vpack.c.bf16 %v485, %v485
    %487 = vst [vmem:[#allocation4 + $0x10] sm:$0x7] %v486
    %s488 = scalar_lea.vmem [#allocation3], 18
    %v489 = vld [vmem:[%s488] ss:$2 sm:$0x3f]
    %v490 = vpack.c.bf16 %v489, %v489
    %491 = vst [vmem:[#allocation4 + $0x14] sm:$0x7] %v490
    %v492 = vld [vmem:[#allocation4] sm:$0xff]
    %v493 = vld [vmem:[#allocation4 + $0x8] sm:$0xf]
    %v494 = vld [vmem:[#allocation4 + $0xc] sm:$0xff]
    %v495 = vld [vmem:[#allocation4 + $0x14] sm:$0xf]
    %v496 = vld [vmem:[%s3] sm:$0xf]
    %v497 = vld [vmem:[%s3 + $0x4] sm:$0xf]
    %v498 = vld [vmem:[%s3 + $0x8] sm:$0xf]
    %v499 = vld [vmem:[%s3 + $0xc] sm:$0xf]
    %v500 = vld [vmem:[%s3 + $0x10] sm:$0xf]
    %v501 = vld [vmem:[%s3 + $0x14] sm:$0xf]
    %v502 = vld [vmem:[%s3 + $0x18] sm:$0xf]
    %v503 = vld [vmem:[%s3 + $0x1c] sm:$0xf]
    %v504 = vld [vmem:[%s3 + $0x20] sm:$0xf]
    %v505 = vld [vmem:[%s3 + $0x24] sm:$0xf]
    %v506 = vld [vmem:[%s3 + $0x28] sm:$0xf]
    %v507 = vld [vmem:[%s3 + $0x2c] sm:$0xf]
    %v508 = vld [vmem:[%s3 + $0x30] sm:$0xf]
    %v509 = vld [vmem:[%s3 + $0x34] sm:$0xf]
    %v510 = vld [vmem:[%s3 + $0x38] sm:$0xf]
    %v511 = vld [vmem:[%s3 + $0x3c] sm:$0xf]
    %v512 = vld [vmem:[%s3 + $0x40] sm:$0xf]
    %v513 = vld [vmem:[%s3 + $0x44] sm:$0xf]
    %v514 = vld [vmem:[%s3 + $0x48] sm:$0xf]
    %v515 = vld [vmem:[%s3 + $0x4c] sm:$0xf]
    %v516 = vld [vmem:[%s3 + $0x50] sm:$0xf]
    %v517 = vld [vmem:[%s3 + $0x54] sm:$0xf]
    %v518 = vld [vmem:[%s3 + $0x58] sm:$0xf]
    %v519 = vld [vmem:[%s3 + $0x5c] sm:$0xf]
    %v520 = vld [vmem:[%s3 + $0x60] sm:$0xf]
    %v521 = vld [vmem:[%s3 + $0x64] sm:$0xf]
    %v522 = vld [vmem:[%s3 + $0x68] sm:$0xf]
    %v523 = vld [vmem:[%s3 + $0x6c] sm:$0xf]
    %v524 = vld [vmem:[%s3 + $0x70] sm:$0xf]
    %v525 = vld [vmem:[%s3 + $0x74] sm:$0xf]
    %v526 = vld [vmem:[%s3 + $0x78] sm:$0xf]
    %v527 = vld [vmem:[%s3 + $0x7c] sm:$0xf]
    %v528 = vld [vmem:[%s3 + $0x80] sm:$0xf]
    %v529 = vld [vmem:[%s3 + $0x84] sm:$0xf]
    %v530 = vld [vmem:[%s3 + $0x88] sm:$0xf]
    %v531 = vld [vmem:[%s3 + $0x8c] sm:$0xf]
    %v532 = vld [vmem:[%s3 + $0x90] sm:$0xf]
    %v533 = vld [vmem:[%s3 + $0x94] sm:$0xf]
    %v534 = vld [vmem:[%s3 + $0x98] sm:$0xf]
    %v535 = vld [vmem:[%s3 + $0x9c] sm:$0xf]
    %v536 = vld [vmem:[%s3 + $0xa0] sm:$0xf]
    %v537 = vld [vmem:[%s3 + $0xa4] sm:$0xf]
    %v538 = vld [vmem:[%s3 + $0xa8] sm:$0xf]
    %v539 = vld [vmem:[%s3 + $0xac] sm:$0xf]
    %v540 = vld [vmem:[%s3 + $0xb0] sm:$0xf]
    %v541 = vld [vmem:[%s3 + $0xb4] sm:$0xf]
    %v542 = vld [vmem:[%s3 + $0xb8] sm:$0xf]
    %v543 = vld [vmem:[%s3 + $0xbc] sm:$0xf]
    %v544 = vld [vmem:[%s4] sm:$0x1]
    %v546 = vlaneseq
    %v547 = vshrl.u32 %v546, 7
    %v548 = vsub.s32 0, %v547
    %v549 = vrot.slane %v544, %v548
    %v555 = vunpack.c.l.b16 %v492
    %v556 = vunpack.c.h.b16 %v492
    %v557 = vunpack.c.l.b16 %v493
    %v558 = vunpack.c.l.b16 %v494
    %v559 = vunpack.c.h.b16 %v494
    %v560 = vunpack.c.l.b16 %v495
    %v561 = vpack.c.b16 %v558, %v555
    %v562 = vpack.c.b16 %v559, %v556
    %v563 = vpack.c.b16 %v560, %v557
    %v615 = vunpack.c.l.b16 %v496
    %v616 = vunpack.c.l.b16 %v497
    %v617 = vunpack.c.l.b16 %v498
    %v618 = vunpack.c.l.b16 %v499
    %v619 = vunpack.c.l.b16 %v500
    %v620 = vunpack.c.l.b16 %v501
    %v621 = vunpack.c.l.b16 %v502
    %v622 = vunpack.c.l.b16 %v503
    %v623 = vunpack.c.l.b16 %v504
    %v624 = vunpack.c.l.b16 %v505
    %v625 = vunpack.c.l.b16 %v506
    %v626 = vunpack.c.l.b16 %v507
    %v627 = vunpack.c.l.b16 %v508
    %v628 = vunpack.c.l.b16 %v509
    %v629 = vunpack.c.l.b16 %v510
    %v630 = vunpack.c.l.b16 %v511
    %v631 = vunpack.c.l.b16 %v512
    %v632 = vunpack.c.l.b16 %v513
    %v633 = vunpack.c.l.b16 %v514
    %v634 = vunpack.c.l.b16 %v515
    %v635 = vunpack.c.l.b16 %v516
    %v636 = vunpack.c.l.b16 %v517
    %v637 = vunpack.c.l.b16 %v518
    %v638 = vunpack.c.l.b16 %v519
    %v639 = vunpack.c.l.b16 %v520
    %v640 = vunpack.c.l.b16 %v521
    %v641 = vunpack.c.l.b16 %v522
    %v642 = vunpack.c.l.b16 %v523
    %v643 = vunpack.c.l.b16 %v524
    %v644 = vunpack.c.l.b16 %v525
    %v645 = vunpack.c.l.b16 %v526
    %v646 = vunpack.c.l.b16 %v527
    %v647 = vunpack.c.l.b16 %v528
    %v648 = vunpack.c.l.b16 %v529
    %v649 = vunpack.c.l.b16 %v530
    %v650 = vunpack.c.l.b16 %v531
    %v651 = vunpack.c.l.b16 %v532
    %v652 = vunpack.c.l.b16 %v533
    %v653 = vunpack.c.l.b16 %v534
    %v654 = vunpack.c.l.b16 %v535
    %v655 = vunpack.c.l.b16 %v536
    %v656 = vunpack.c.l.b16 %v537
    %v657 = vunpack.c.l.b16 %v538
    %v658 = vunpack.c.l.b16 %v539
    %v659 = vunpack.c.l.b16 %v540
    %v660 = vunpack.c.l.b16 %v541
    %v661 = vunpack.c.l.b16 %v542
    %v662 = vunpack.c.l.b16 %v543
    %v663 = vpack.c.b16 %v616, %v615
    %v664 = vpack.c.b16 %v618, %v617
    %v665 = vpack.c.b16 %v620, %v619
    %v666 = vpack.c.b16 %v622, %v621
    %v667 = vpack.c.b16 %v624, %v623
    %v668 = vpack.c.b16 %v626, %v625
    %v669 = vpack.c.b16 %v628, %v627
    %v670 = vpack.c.b16 %v630, %v629
    %v671 = vpack.c.b16 %v632, %v631
    %v672 = vpack.c.b16 %v634, %v633
    %v673 = vpack.c.b16 %v636, %v635
    %v674 = vpack.c.b16 %v638, %v637
    %v675 = vpack.c.b16 %v640, %v639
    %v676 = vpack.c.b16 %v642, %v641
    %v677 = vpack.c.b16 %v644, %v643
    %v678 = vpack.c.b16 %v646, %v645
    %v679 = vpack.c.b16 %v648, %v647
    %v680 = vpack.c.b16 %v650, %v649
    %v681 = vpack.c.b16 %v652, %v651
    %v682 = vpack.c.b16 %v654, %v653
    %v683 = vpack.c.b16 %v656, %v655
    %v684 = vpack.c.b16 %v658, %v657
    %v685 = vpack.c.b16 %v660, %v659
    %v686 = vpack.c.b16 %v662, %v661
    %711 = vmatprep.subr.bf16.mxu0 0
    %712 = vmatpush1.bf16.msra.mxu0 %v670
    %713 = vmatprep.subr.bf16.mxu0 0
    %714 = vmatpush1.bf16.msra.mxu0 %v669
    %715 = vmatprep.subr.bf16.mxu0 0
    %716 = vmatpush1.bf16.msra.mxu0 %v668
    %717 = vmatprep.subr.bf16.mxu0 0
    %718 = vmatpush1.bf16.msra.mxu0 %v667
    %719 = vmatprep.subr.bf16.mxu0 0
    %720 = vmatpush1.bf16.msra.mxu0 %v666
    %721 = vmatprep.subr.bf16.mxu0 0
    %722 = vmatpush1.bf16.msra.mxu0 %v665
    %723 = vmatprep.subr.bf16.mxu0 0
    %724 = vmatpush1.bf16.msra.mxu0 %v664
    %725 = vmatprep.subr.bf16.mxu0 0
    %726 = vmatpush1.bf16.msra.mxu0 %v663
    %727 = vmatprep.subr.bf16.mxu0 0
    %728 = vmatpush2.bf16.msra.mxu0 %v678
    %729 = vmatprep.subr.bf16.mxu0 0
    %730 = vmatpush2.bf16.msra.mxu0 %v677
    %731 = vmatprep.subr.bf16.mxu0 0
    %732 = vmatpush2.bf16.msra.mxu0 %v676
    %733 = vmatprep.subr.bf16.mxu0 0
    %734 = vmatpush2.bf16.msra.mxu0 %v675
    %735 = vmatprep.subr.bf16.mxu0 0
    %736 = vmatpush2.bf16.msra.mxu0 %v674
    %737 = vmatprep.subr.bf16.mxu0 0
    %738 = vmatpush2.bf16.msra.mxu0 %v673
    %739 = vmatprep.subr.bf16.mxu0 0
    %740 = vmatpush2.bf16.msra.mxu0 %v672
    %741 = vmatprep.subr.bf16.mxu0 0
    %742 = vmatpush2.bf16.msra.mxu0 %v671
    %743 = vmatprep.mubr.bf16.mxu0 %v562
    %744 = vmatmul.mubr.bf16.gmra.mxu0 %v561
    %v745 = vpop.f32.mrf.mxu0
    %v746 = vadd.f32 %v549, %v745
    %v747 = vpop.f32.mrf.mxu0
    %v748 = vpop.f32.mrf.mxu0
    %v749 = vadd.f32 %v549, %v748
    %v750 = vpop.f32.mrf.mxu0
    %751 = vdwg.mxu0
    %752 = vmatprep.subr.bf16.mxu0 0
    %753 = vmatpush1.bf16.msra.mxu0 %v686
    %754 = vmatprep.subr.bf16.mxu0 0
    %755 = vmatpush1.bf16.msra.mxu0 %v685
    %756 = vmatprep.subr.bf16.mxu0 0
    %757 = vmatpush1.bf16.msra.mxu0 %v684
    %758 = vmatprep.subr.bf16.mxu0 0
    %759 = vmatpush1.bf16.msra.mxu0 %v683
    %760 = vmatprep.subr.bf16.mxu0 0
    %761 = vmatpush1.bf16.msra.mxu0 %v682
    %762 = vmatprep.subr.bf16.mxu0 0
    %763 = vmatpush1.bf16.msra.mxu0 %v681
    %764 = vmatprep.subr.bf16.mxu0 0
    %765 = vmatpush1.bf16.msra.mxu0 %v680
    %766 = vmatprep.subr.bf16.mxu0 0
    %767 = vmatpush1.bf16.msra.mxu0 %v679
    %768 = vmatprep.subr.bf16.mxu0 0
    %769 = vmatpush2.bf16.msra.mxu0 0
    %770 = vmatprep.subr.bf16.mxu0 0
    %771 = vmatpush2.bf16.msra.mxu0 0
    %772 = vmatprep.subr.bf16.mxu0 0
    %773 = vmatpush2.bf16.msra.mxu0 0
    %774 = vmatprep.subr.bf16.mxu0 0
    %775 = vmatpush2.bf16.msra.mxu0 0
    %776 = vmatprep.subr.bf16.mxu0 0
    %777 = vmatpush2.bf16.msra.mxu0 0
    %778 = vmatprep.subr.bf16.mxu0 0
    %779 = vmatpush2.bf16.msra.mxu0 0
    %780 = vmatprep.subr.bf16.mxu0 0
    %781 = vmatpush2.bf16.msra.mxu0 0
    %782 = vmatprep.subr.bf16.mxu0 0
    %783 = vmatpush2.bf16.msra.mxu0 0
    %784 = vmatprep.mubr.bf16.mxu0 0
    %785 = vmatmul.mubr.bf16.gmra.mxu0 %v563
    %v786 = vpop.f32.mrf.mxu0
    %v787 = vadd.f32 %v746, %v786
    %v788 = vpop.f32.mrf.mxu0
    %v789 = vpop.f32.mrf.mxu0
    %v790 = vadd.f32 %v749, %v789
    %v791 = vpop.f32.mrf.mxu0
    %792 = vdwg.mxu0
    %v793 = vmax.f32 %v787, 0.0
    %v794 = vmax.f32 %v790, 0.0
    %795 = vst [vmem:[#allocation5] sm:$0xff] %v793
    %796 = vst [vmem:[#allocation5 + $0x8] sm:$0xff] %v794
    %v797 = vld [vmem:[#allocation5] sm:$0x1]
    %v798 = vpack.c.bf16 %v797, %v797
    %vm799 = vcmask 1040384
    %vm800 = vsmask.f32 256
    %vm801 = vmand %vm799, %vm800
    %v802 = vld [vmem:[#allocation6] sm:$0x1]
    %v803 = vsel %vm801, %v798, %v802
    %804 = vst [vmem:[#allocation6] sm:$0x1] %v803
    %v805 = vld [vmem:[#allocation5 + $0x1] sm:$0x1]
    %v806 = vpack.c.bf16 %v805, %v805
    %v807 = vld [vmem:[#allocation6 + $0x1] sm:$0x1]
    %v808 = vsel %vm801, %v806, %v807
    %809 = vst [vmem:[#allocation6 + $0x1] sm:$0x1] %v808
    %v810 = vld [vmem:[#allocation5 + $0x2] sm:$0x1]
    %v811 = vpack.c.bf16 %v810, %v810
    %v812 = vld [vmem:[#allocation6 + $0x2] sm:$0x1]
    %v813 = vsel %vm801, %v811, %v812
    %814 = vst [vmem:[#allocation6 + $0x2] sm:$0x1] %v813
    %v815 = vld [vmem:[#allocation5 + $0x3] sm:$0x1]
    %v816 = vpack.c.bf16 %v815, %v815
    %v817 = vld [vmem:[#allocation6 + $0x3] sm:$0x1]
    %v818 = vsel %vm801, %v816, %v817
    %819 = vst [vmem:[#allocation6 + $0x3] sm:$0x1] %v818
    %v820 = vld [vmem:[#allocation5 + $0x4] sm:$0x1]
    %v821 = vpack.c.bf16 %v820, %v820
    %v822 = vld [vmem:[#allocation6 + $0x4] sm:$0x1]
    %v823 = vsel %vm801, %v821, %v822
    %824 = vst [vmem:[#allocation6 + $0x4] sm:$0x1] %v823
    %v825 = vld [vmem:[#allocation5 + $0x5] sm:$0x1]
    %v826 = vpack.c.bf16 %v825, %v825
    %v827 = vld [vmem:[#allocation6 + $0x5] sm:$0x1]
    %v828 = vsel %vm801, %v826, %v827
    %829 = vst [vmem:[#allocation6 + $0x5] sm:$0x1] %v828
    %v830 = vld [vmem:[#allocation5 + $0x8] sm:$0x1]
    %v831 = vpack.c.bf16 %v830, %v830
    %v834 = vunpack.c.l.s4 1966171168
    %v835 = vunpack.c.0.s8 %v834
    %v836 = vlaneseq
    %v837 = vshrl.u32 %v836, 7
    %v838 = vsub.s32 %v835, %v837
    %v839 = vrot.slane %v831, %v838
    %v841 = vunpack.c.l.s4 1966171168
    %v842 = vunpack.c.0.s8 %v841
    %v843 = vlaneseq
    %v844 = vshrl.u32 %v843, 7
    %v845 = vsub.s32 %v842, %v844
    %v846 = vrot.slane %v839, %v845
    %v848 = vshll.u32 %v846, 16
    %vm851 = vsmask.f32 7938
    %vm852 = vmand %vm799, %vm851
    %v853 = vld [vmem:[#allocation6] sm:$0x1]
    %v854 = vsel %vm852, %v848, %v853
    %855 = vst [vmem:[#allocation6] sm:$0x1] %v854
    %v856 = vld [vmem:[#allocation5 + $0x9] sm:$0x1]
    %v857 = vpack.c.bf16 %v856, %v856
    %v860 = vunpack.c.l.s4 1966171168
    %v861 = vunpack.c.0.s8 %v860
    %v862 = vlaneseq
    %v863 = vshrl.u32 %v862, 7
    %v864 = vsub.s32 %v861, %v863
    %v865 = vrot.slane %v857, %v864
    %v867 = vunpack.c.l.s4 1966171168
    %v868 = vunpack.c.0.s8 %v867
    %v869 = vlaneseq
    %v870 = vshrl.u32 %v869, 7
    %v871 = vsub.s32 %v868, %v870
    %v872 = vrot.slane %v865, %v871
    %v874 = vshll.u32 %v872, 16
    %v877 = vld [vmem:[#allocation6 + $0x1] sm:$0x1]
    %v878 = vsel %vm852, %v874, %v877
    %879 = vst [vmem:[#allocation6 + $0x1] sm:$0x1] %v878
    %v880 = vld [vmem:[#allocation5 + $0xa] sm:$0x1]
    %v881 = vpack.c.bf16 %v880, %v880
    %v884 = vunpack.c.l.s4 1966171168
    %v885 = vunpack.c.0.s8 %v884
    %v886 = vlaneseq
    %v887 = vshrl.u32 %v886, 7
    %v888 = vsub.s32 %v885, %v887
    %v889 = vrot.slane %v881, %v888
    %v891 = vunpack.c.l.s4 1966171168
    %v892 = vunpack.c.0.s8 %v891
    %v893 = vlaneseq
    %v894 = vshrl.u32 %v893, 7
    %v895 = vsub.s32 %v892, %v894
    %v896 = vrot.slane %v889, %v895
    %v898 = vshll.u32 %v896, 16
    %v901 = vld [vmem:[#allocation6 + $0x2] sm:$0x1]
    %v902 = vsel %vm852, %v898, %v901
    %903 = vst [vmem:[#allocation6 + $0x2] sm:$0x1] %v902
    %v904 = vld [vmem:[#allocation5 + $0xb] sm:$0x1]
    %v905 = vpack.c.bf16 %v904, %v904
    %v908 = vunpack.c.l.s4 1966171168
    %v909 = vunpack.c.0.s8 %v908
    %v910 = vlaneseq
    %v911 = vshrl.u32 %v910, 7
    %v912 = vsub.s32 %v909, %v911
    %v913 = vrot.slane %v905, %v912
    %v915 = vunpack.c.l.s4 1966171168
    %v916 = vunpack.c.0.s8 %v915
    %v917 = vlaneseq
    %v918 = vshrl.u32 %v917, 7
    %v919 = vsub.s32 %v916, %v918
    %v920 = vrot.slane %v913, %v919
    %v922 = vshll.u32 %v920, 16
    %v925 = vld [vmem:[#allocation6 + $0x3] sm:$0x1]
    %v926 = vsel %vm852, %v922, %v925
    %927 = vst [vmem:[#allocation6 + $0x3] sm:$0x1] %v926
    %v928 = vld [vmem:[#allocation5 + $0xc] sm:$0x1]
    %v929 = vpack.c.bf16 %v928, %v928
    %v932 = vunpack.c.l.s4 1966171168
    %v933 = vunpack.c.0.s8 %v932
    %v934 = vlaneseq
    %v935 = vshrl.u32 %v934, 7
    %v936 = vsub.s32 %v933, %v935
    %v937 = vrot.slane %v929, %v936
    %v939 = vunpack.c.l.s4 1966171168
    %v940 = vunpack.c.0.s8 %v939
    %v941 = vlaneseq
    %v942 = vshrl.u32 %v941, 7
    %v943 = vsub.s32 %v940, %v942
    %v944 = vrot.slane %v937, %v943
    %v946 = vshll.u32 %v944, 16
    %v949 = vld [vmem:[#allocation6 + $0x4] sm:$0x1]
    %v950 = vsel %vm852, %v946, %v949
    %951 = vst [vmem:[#allocation6 + $0x4] sm:$0x1] %v950
    %v952 = vld [vmem:[#allocation5 + $0xd] sm:$0x1]
    %v953 = vpack.c.bf16 %v952, %v952
    %v956 = vunpack.c.l.s4 1966171168
    %v957 = vunpack.c.0.s8 %v956
    %v958 = vlaneseq
    %v959 = vshrl.u32 %v958, 7
    %v960 = vsub.s32 %v957, %v959
    %v961 = vrot.slane %v953, %v960
    %v963 = vunpack.c.l.s4 1966171168
    %v964 = vunpack.c.0.s8 %v963
    %v965 = vlaneseq
    %v966 = vshrl.u32 %v965, 7
    %v967 = vsub.s32 %v964, %v966
    %v968 = vrot.slane %v961, %v967
    %v970 = vshll.u32 %v968, 16
    %v973 = vld [vmem:[#allocation6 + $0x5] sm:$0x1]
    %v974 = vsel %vm852, %v970, %v973
    %975 = vst [vmem:[#allocation6 + $0x5] sm:$0x1] %v974
    %v976 = vld [vmem:[#allocation6] sm:$0x3f]
    %v977 = vld [vmem:[%s5] sm:$0xf]
    %v978 = vld [vmem:[%s5 + $0x4] sm:$0xf]
    %v979 = vld [vmem:[%s5 + $0x8] sm:$0xf]
    %v980 = vld [vmem:[%s5 + $0xc] sm:$0xf]
    %v981 = vld [vmem:[%s5 + $0x10] sm:$0xf]
    %v982 = vld [vmem:[%s5 + $0x14] sm:$0xf]
    %v983 = vld [vmem:[%s5 + $0x18] sm:$0xf]
    %v984 = vld [vmem:[%s5 + $0x1c] sm:$0xf]
    %v985 = vld [vmem:[%s5 + $0x20] sm:$0xf]
    %v986 = vld [vmem:[%s5 + $0x24] sm:$0xf]
    %v987 = vld [vmem:[%s5 + $0x28] sm:$0xf]
    %v988 = vld [vmem:[%s5 + $0x2c] sm:$0xf]
    %v989 = vld [vmem:[%s5 + $0x30] sm:$0xf]
    %v990 = vld [vmem:[%s5 + $0x34] sm:$0xf]
    %v991 = vld [vmem:[%s5 + $0x38] sm:$0xf]
    %v992 = vld [vmem:[%s5 + $0x3c] sm:$0xf]
    %v993 = vld [vmem:[%s5 + $0x40] sm:$0xf]
    %v994 = vld [vmem:[%s5 + $0x44] sm:$0xf]
    %v995 = vld [vmem:[%s5 + $0x48] sm:$0xf]
    %v996 = vld [vmem:[%s5 + $0x4c] sm:$0xf]
    %v997 = vld [vmem:[%s5 + $0x50] sm:$0xf]
    %v998 = vld [vmem:[%s5 + $0x54] sm:$0xf]
    %v999 = vld [vmem:[%s5 + $0x58] sm:$0xf]
    %v1000 = vld [vmem:[%s5 + $0x5c] sm:$0xf]
    %v1001 = vld [vmem:[%s5 + $0x60] sm:$0xf]
    %v1002 = vld [vmem:[%s5 + $0x64] sm:$0xf]
    %v1003 = vld [vmem:[%s5 + $0x68] sm:$0xf]
    %v1004 = vld [vmem:[%s5 + $0x6c] sm:$0xf]
    %v1005 = vld [vmem:[%s5 + $0x70] sm:$0xf]
    %v1006 = vld [vmem:[%s5 + $0x74] sm:$0xf]
    %v1007 = vld [vmem:[%s5 + $0x78] sm:$0xf]
    %v1008 = vld [vmem:[%s5 + $0x7c] sm:$0xf]
    %v1009 = vld [vmem:[%s5 + $0x80] sm:$0xf]
    %v1010 = vld [vmem:[%s5 + $0x84] sm:$0xf]
    %v1011 = vld [vmem:[%s5 + $0x88] sm:$0xf]
    %v1012 = vld [vmem:[%s5 + $0x8c] sm:$0xf]
    %v1013 = vld [vmem:[%s5 + $0x90] sm:$0xf]
    %v1014 = vld [vmem:[%s5 + $0x94] sm:$0xf]
    %v1015 = vld [vmem:[%s5 + $0x98] sm:$0xf]
    %v1016 = vld [vmem:[%s5 + $0x9c] sm:$0xf]
    %v1017 = vld [vmem:[%s5 + $0xa0] sm:$0xf]
    %v1018 = vld [vmem:[%s5 + $0xa4] sm:$0xf]
    %v1019 = vld [vmem:[%s5 + $0xa8] sm:$0xf]
    %v1020 = vld [vmem:[%s5 + $0xac] sm:$0xf]
    %v1021 = vld [vmem:[%s5 + $0xb0] sm:$0xf]
    %v1022 = vld [vmem:[%s5 + $0xb4] sm:$0xf]
    %v1023 = vld [vmem:[%s5 + $0xb8] sm:$0xf]
    %v1024 = vld [vmem:[%s5 + $0xbc] sm:$0xf]
    %v1025 = vld [vmem:[%s5 + $0xc0] sm:$0xf]
    %v1026 = vld [vmem:[%s5 + $0xc4] sm:$0xf]
    %v1027 = vld [vmem:[%s5 + $0xc8] sm:$0xf]
    %v1028 = vld [vmem:[%s5 + $0xcc] sm:$0xf]
    %v1029 = vld [vmem:[%s5 + $0xd0] sm:$0xf]
    %v1030 = vld [vmem:[%s5 + $0xd4] sm:$0xf]
    %v1031 = vld [vmem:[%s5 + $0xd8] sm:$0xf]
    %v1032 = vld [vmem:[%s5 + $0xdc] sm:$0xf]
    %v1033 = vld [vmem:[%s5 + $0xe0] sm:$0xf]
    %v1034 = vld [vmem:[%s5 + $0xe4] sm:$0xf]
    %v1035 = vld [vmem:[%s5 + $0xe8] sm:$0xf]
    %v1036 = vld [vmem:[%s5 + $0xec] sm:$0xf]
    %v1037 = vld [vmem:[%s5 + $0xf0] sm:$0xf]
    %v1038 = vld [vmem:[%s5 + $0xf4] sm:$0xf]
    %v1039 = vld [vmem:[%s5 + $0xf8] sm:$0xf]
    %v1040 = vld [vmem:[%s5 + $0xfc] sm:$0xf]
    %v1041 = vld [vmem:[%s5 + $0x100] sm:$0xf]
    %v1042 = vld [vmem:[%s5 + $0x104] sm:$0xf]
    %v1043 = vld [vmem:[%s5 + $0x108] sm:$0xf]
    %v1044 = vld [vmem:[%s5 + $0x10c] sm:$0xf]
    %v1045 = vld [vmem:[%s5 + $0x110] sm:$0xf]
    %v1046 = vld [vmem:[%s5 + $0x114] sm:$0xf]
    %v1047 = vld [vmem:[%s5 + $0x118] sm:$0xf]
    %v1048 = vld [vmem:[%s5 + $0x11c] sm:$0xf]
    %v1049 = vld [vmem:[%s5 + $0x120] sm:$0xf]
    %v1050 = vld [vmem:[%s5 + $0x124] sm:$0xf]
    %v1051 = vld [vmem:[%s5 + $0x128] sm:$0xf]
    %v1052 = vld [vmem:[%s5 + $0x12c] sm:$0xf]
    %v1053 = vld [vmem:[%s5 + $0x130] sm:$0xf]
    %v1054 = vld [vmem:[%s5 + $0x134] sm:$0xf]
    %v1055 = vld [vmem:[%s5 + $0x138] sm:$0xf]
    %v1056 = vld [vmem:[%s5 + $0x13c] sm:$0xf]
    %v1057 = vld [vmem:[%s5 + $0x140] sm:$0xf]
    %v1058 = vld [vmem:[%s5 + $0x144] sm:$0xf]
    %v1059 = vld [vmem:[%s5 + $0x148] sm:$0xf]
    %v1060 = vld [vmem:[%s5 + $0x14c] sm:$0xf]
    %v1061 = vld [vmem:[%s5 + $0x150] sm:$0xf]
    %v1062 = vld [vmem:[%s5 + $0x154] sm:$0xf]
    %v1063 = vld [vmem:[%s5 + $0x158] sm:$0xf]
    %v1064 = vld [vmem:[%s5 + $0x15c] sm:$0xf]
    %v1065 = vld [vmem:[%s5 + $0x160] sm:$0xf]
    %v1066 = vld [vmem:[%s5 + $0x164] sm:$0xf]
    %v1067 = vld [vmem:[%s5 + $0x168] sm:$0xf]
    %v1068 = vld [vmem:[%s5 + $0x16c] sm:$0xf]
    %v1069 = vld [vmem:[%s5 + $0x170] sm:$0xf]
    %v1070 = vld [vmem:[%s5 + $0x174] sm:$0xf]
    %v1071 = vld [vmem:[%s5 + $0x178] sm:$0xf]
    %v1072 = vld [vmem:[%s5 + $0x17c] sm:$0xf]
    %v1073 = vld [vmem:[%s6] sm:$0x1]
    %v1075 = vlaneseq
    %v1076 = vshrl.u32 %v1075, 7
    %v1077 = vsub.s32 0, %v1076
    %v1078 = vrot.slane %v1073, %v1077
    %v1081 = vcombine.high %v976, %v976
    %v1083 = vunpack.c.l.s4 1966171168
    %v1084 = vunpack.c.0.s8 %v1083
    %v1085 = vlaneseq
    %v1086 = vshrl.u32 %v1085, 7
    %v1087 = vsub.s32 %v1084, %v1086
    %v1088 = vrot.slane %v976, %v1087
    %v1090 = vunpack.c.l.s4 1966171168
    %v1091 = vunpack.c.0.s8 %v1090
    %v1092 = vlaneseq
    %v1093 = vshrl.u32 %v1092, 7
    %v1094 = vsub.s32 %v1091, %v1093
    %v1095 = vrot.slane %v1081, %v1094
    %v1096 = vcombine.high %v1088, %v1088
    %v1097 = vcombine.high %v1095, %v1095
    %v1099 = vunpack.c.l.s4 1966171168
    %v1100 = vunpack.c.0.s8 %v1099
    %v1101 = vlaneseq
    %v1102 = vshrl.u32 %v1101, 7
    %v1103 = vsub.s32 %v1100, %v1102
    %v1104 = vrot.slane %v1088, %v1103
    %v1106 = vunpack.c.l.s4 1966171168
    %v1107 = vunpack.c.0.s8 %v1106
    %v1108 = vlaneseq
    %v1109 = vshrl.u32 %v1108, 7
    %v1110 = vsub.s32 %v1107, %v1109
    %v1111 = vrot.slane %v1095, %v1110
    %v1113 = vunpack.c.l.s4 1966171168
    %v1114 = vunpack.c.0.s8 %v1113
    %v1115 = vlaneseq
    %v1116 = vshrl.u32 %v1115, 7
    %v1117 = vsub.s32 %v1114, %v1116
    %v1118 = vrot.slane %v1096, %v1117
    %v1120 = vunpack.c.l.s4 1966171168
    %v1121 = vunpack.c.0.s8 %v1120
    %v1122 = vlaneseq
    %v1123 = vshrl.u32 %v1122, 7
    %v1124 = vsub.s32 %v1121, %v1123
    %v1125 = vrot.slane %v1097, %v1124
    %v1126 = vcombine.high %v1104, %v1104
    %v1127 = vcombine.high %v1118, %v1118
    %v1230 = vunpack.c.l.b16 %v977
    %v1231 = vunpack.c.l.b16 %v978
    %v1232 = vunpack.c.l.b16 %v979
    %v1233 = vunpack.c.l.b16 %v980
    %v1234 = vunpack.c.l.b16 %v981
    %v1235 = vunpack.c.l.b16 %v982
    %v1236 = vunpack.c.l.b16 %v983
    %v1237 = vunpack.c.l.b16 %v984
    %v1238 = vunpack.c.l.b16 %v985
    %v1239 = vunpack.c.l.b16 %v986
    %v1240 = vunpack.c.l.b16 %v987
    %v1241 = vunpack.c.l.b16 %v988
    %v1242 = vunpack.c.l.b16 %v989
    %v1243 = vunpack.c.l.b16 %v990
    %v1244 = vunpack.c.l.b16 %v991
    %v1245 = vunpack.c.l.b16 %v992
    %v1246 = vunpack.c.l.b16 %v993
    %v1247 = vunpack.c.l.b16 %v994
    %v1248 = vunpack.c.l.b16 %v995
    %v1249 = vunpack.c.l.b16 %v996
    %v1250 = vunpack.c.l.b16 %v997
    %v1251 = vunpack.c.l.b16 %v998
    %v1252 = vunpack.c.l.b16 %v999
    %v1253 = vunpack.c.l.b16 %v1000
    %v1254 = vunpack.c.l.b16 %v1001
    %v1255 = vunpack.c.l.b16 %v1002
    %v1256 = vunpack.c.l.b16 %v1003
    %v1257 = vunpack.c.l.b16 %v1004
    %v1258 = vunpack.c.l.b16 %v1005
    %v1259 = vunpack.c.l.b16 %v1006
    %v1260 = vunpack.c.l.b16 %v1007
    %v1261 = vunpack.c.l.b16 %v1008
    %v1262 = vunpack.c.l.b16 %v1009
    %v1263 = vunpack.c.l.b16 %v1010
    %v1264 = vunpack.c.l.b16 %v1011
    %v1265 = vunpack.c.l.b16 %v1012
    %v1266 = vunpack.c.l.b16 %v1013
    %v1267 = vunpack.c.l.b16 %v1014
    %v1268 = vunpack.c.l.b16 %v1015
    %v1269 = vunpack.c.l.b16 %v1016
    %v1270 = vunpack.c.l.b16 %v1017
    %v1271 = vunpack.c.l.b16 %v1018
    %v1272 = vunpack.c.l.b16 %v1019
    %v1273 = vunpack.c.l.b16 %v1020
    %v1274 = vunpack.c.l.b16 %v1021
    %v1275 = vunpack.c.l.b16 %v1022
    %v1276 = vunpack.c.l.b16 %v1023
    %v1277 = vunpack.c.l.b16 %v1024
    %v1278 = vunpack.c.l.b16 %v1025
    %v1279 = vunpack.c.l.b16 %v1026
    %v1280 = vunpack.c.l.b16 %v1027
    %v1281 = vunpack.c.l.b16 %v1028
    %v1282 = vunpack.c.l.b16 %v1029
    %v1283 = vunpack.c.l.b16 %v1030
    %v1284 = vunpack.c.l.b16 %v1031
    %v1285 = vunpack.c.l.b16 %v1032
    %v1286 = vunpack.c.l.b16 %v1033
    %v1287 = vunpack.c.l.b16 %v1034
    %v1288 = vunpack.c.l.b16 %v1035
    %v1289 = vunpack.c.l.b16 %v1036
    %v1290 = vunpack.c.l.b16 %v1037
    %v1291 = vunpack.c.l.b16 %v1038
    %v1292 = vunpack.c.l.b16 %v1039
    %v1293 = vunpack.c.l.b16 %v1040
    %v1294 = vunpack.c.l.b16 %v1041
    %v1295 = vunpack.c.l.b16 %v1042
    %v1296 = vunpack.c.l.b16 %v1043
    %v1297 = vunpack.c.l.b16 %v1044
    %v1298 = vunpack.c.l.b16 %v1045
    %v1299 = vunpack.c.l.b16 %v1046
    %v1300 = vunpack.c.l.b16 %v1047
    %v1301 = vunpack.c.l.b16 %v1048
    %v1302 = vunpack.c.l.b16 %v1049
    %v1303 = vunpack.c.l.b16 %v1050
    %v1304 = vunpack.c.l.b16 %v1051
    %v1305 = vunpack.c.l.b16 %v1052
    %v1306 = vunpack.c.l.b16 %v1053
    %v1307 = vunpack.c.l.b16 %v1054
    %v1308 = vunpack.c.l.b16 %v1055
    %v1309 = vunpack.c.l.b16 %v1056
    %v1310 = vunpack.c.l.b16 %v1057
    %v1311 = vunpack.c.l.b16 %v1058
    %v1312 = vunpack.c.l.b16 %v1059
    %v1313 = vunpack.c.l.b16 %v1060
    %v1314 = vunpack.c.l.b16 %v1061
    %v1315 = vunpack.c.l.b16 %v1062
    %v1316 = vunpack.c.l.b16 %v1063
    %v1317 = vunpack.c.l.b16 %v1064
    %v1318 = vunpack.c.l.b16 %v1065
    %v1319 = vunpack.c.l.b16 %v1066
    %v1320 = vunpack.c.l.b16 %v1067
    %v1321 = vunpack.c.l.b16 %v1068
    %v1322 = vunpack.c.l.b16 %v1069
    %v1323 = vunpack.c.l.b16 %v1070
    %v1324 = vunpack.c.l.b16 %v1071
    %v1325 = vunpack.c.l.b16 %v1072
    %v1326 = vpack.c.b16 %v1231, %v1230
    %v1327 = vpack.c.b16 %v1233, %v1232
    %v1328 = vpack.c.b16 %v1235, %v1234
    %v1329 = vpack.c.b16 %v1237, %v1236
    %v1330 = vpack.c.b16 %v1239, %v1238
    %v1331 = vpack.c.b16 %v1241, %v1240
    %v1332 = vpack.c.b16 %v1243, %v1242
    %v1333 = vpack.c.b16 %v1245, %v1244
    %v1334 = vpack.c.b16 %v1247, %v1246
    %v1335 = vpack.c.b16 %v1249, %v1248
    %v1336 = vpack.c.b16 %v1251, %v1250
    %v1337 = vpack.c.b16 %v1253, %v1252
    %v1338 = vpack.c.b16 %v1255, %v1254
    %v1339 = vpack.c.b16 %v1257, %v1256
    %v1340 = vpack.c.b16 %v1259, %v1258
    %v1341 = vpack.c.b16 %v1261, %v1260
    %v1342 = vpack.c.b16 %v1263, %v1262
    %v1343 = vpack.c.b16 %v1265, %v1264
    %v1344 = vpack.c.b16 %v1267, %v1266
    %v1345 = vpack.c.b16 %v1269, %v1268
    %v1346 = vpack.c.b16 %v1271, %v1270
    %v1347 = vpack.c.b16 %v1273, %v1272
    %v1348 = vpack.c.b16 %v1275, %v1274
    %v1349 = vpack.c.b16 %v1277, %v1276
    %v1350 = vpack.c.b16 %v1279, %v1278
    %v1351 = vpack.c.b16 %v1281, %v1280
    %v1352 = vpack.c.b16 %v1283, %v1282
    %v1353 = vpack.c.b16 %v1285, %v1284
    %v1354 = vpack.c.b16 %v1287, %v1286
    %v1355 = vpack.c.b16 %v1289, %v1288
    %v1356 = vpack.c.b16 %v1291, %v1290
    %v1357 = vpack.c.b16 %v1293, %v1292
    %v1358 = vpack.c.b16 %v1295, %v1294
    %v1359 = vpack.c.b16 %v1297, %v1296
    %v1360 = vpack.c.b16 %v1299, %v1298
    %v1361 = vpack.c.b16 %v1301, %v1300
    %v1362 = vpack.c.b16 %v1303, %v1302
    %v1363 = vpack.c.b16 %v1305, %v1304
    %v1364 = vpack.c.b16 %v1307, %v1306
    %v1365 = vpack.c.b16 %v1309, %v1308
    %v1366 = vpack.c.b16 %v1311, %v1310
    %v1367 = vpack.c.b16 %v1313, %v1312
    %v1368 = vpack.c.b16 %v1315, %v1314
    %v1369 = vpack.c.b16 %v1317, %v1316
    %v1370 = vpack.c.b16 %v1319, %v1318
    %v1371 = vpack.c.b16 %v1321, %v1320
    %v1372 = vpack.c.b16 %v1323, %v1322
    %v1373 = vpack.c.b16 %v1325, %v1324
    %1422 = vmatprep.subr.bf16.mxu0 0
    %1423 = vmatpush1.bf16.msra.mxu0 %v1333
    %1424 = vmatprep.subr.bf16.mxu0 0
    %1425 = vmatpush1.bf16.msra.mxu0 %v1332
    %1426 = vmatprep.subr.bf16.mxu0 0
    %1427 = vmatpush1.bf16.msra.mxu0 %v1331
    %1428 = vmatprep.subr.bf16.mxu0 0
    %1429 = vmatpush1.bf16.msra.mxu0 %v1330
    %1430 = vmatprep.subr.bf16.mxu0 0
    %1431 = vmatpush1.bf16.msra.mxu0 %v1329
    %1432 = vmatprep.subr.bf16.mxu0 0
    %1433 = vmatpush1.bf16.msra.mxu0 %v1328
    %1434 = vmatprep.subr.bf16.mxu0 0
    %1435 = vmatpush1.bf16.msra.mxu0 %v1327
    %1436 = vmatprep.subr.bf16.mxu0 0
    %1437 = vmatpush1.bf16.msra.mxu0 %v1326
    %1438 = vmatprep.subr.bf16.mxu0 0
    %1439 = vmatpush2.bf16.msra.mxu0 %v1341
    %1440 = vmatprep.subr.bf16.mxu0 0
    %1441 = vmatpush2.bf16.msra.mxu0 %v1340
    %1442 = vmatprep.subr.bf16.mxu0 0
    %1443 = vmatpush2.bf16.msra.mxu0 %v1339
    %1444 = vmatprep.subr.bf16.mxu0 0
    %1445 = vmatpush2.bf16.msra.mxu0 %v1338
    %1446 = vmatprep.subr.bf16.mxu0 0
    %1447 = vmatpush2.bf16.msra.mxu0 %v1337
    %1448 = vmatprep.subr.bf16.mxu0 0
    %1449 = vmatpush2.bf16.msra.mxu0 %v1336
    %1450 = vmatprep.subr.bf16.mxu0 0
    %1451 = vmatpush2.bf16.msra.mxu0 %v1335
    %1452 = vmatprep.subr.bf16.mxu0 0
    %1453 = vmatpush2.bf16.msra.mxu0 %v1334
    %1454 = vmatprep.mubr.bf16.mxu0 %v1118
    %1455 = vmatmul.mubr.bf16.gmra.mxu0 %v1104
    %v1456 = vpop.f32.mrf.mxu0
    %v1457 = vadd.f32 %v1078, %v1456
    %v1458 = vpop.f32.mrf.mxu0
    %v1459 = vpop.f32.mrf.mxu0
    %v1460 = vpop.f32.mrf.mxu0
    %1461 = vdwg.mxu0
    %1462 = vmatprep.subr.bf16.mxu0 0
    %1463 = vmatpush1.bf16.msra.mxu0 %v1349
    %1464 = vmatprep.subr.bf16.mxu0 0
    %1465 = vmatpush1.bf16.msra.mxu0 %v1348
    %1466 = vmatprep.subr.bf16.mxu0 0
    %1467 = vmatpush1.bf16.msra.mxu0 %v1347
    %1468 = vmatprep.subr.bf16.mxu0 0
    %1469 = vmatpush1.bf16.msra.mxu0 %v1346
    %1470 = vmatprep.subr.bf16.mxu0 0
    %1471 = vmatpush1.bf16.msra.mxu0 %v1345
    %1472 = vmatprep.subr.bf16.mxu0 0
    %1473 = vmatpush1.bf16.msra.mxu0 %v1344
    %1474 = vmatprep.subr.bf16.mxu0 0
    %1475 = vmatpush1.bf16.msra.mxu0 %v1343
    %1476 = vmatprep.subr.bf16.mxu0 0
    %1477 = vmatpush1.bf16.msra.mxu0 %v1342
    %1478 = vmatprep.subr.bf16.mxu0 0
    %1479 = vmatpush2.bf16.msra.mxu0 %v1357
    %1480 = vmatprep.subr.bf16.mxu0 0
    %1481 = vmatpush2.bf16.msra.mxu0 %v1356
    %1482 = vmatprep.subr.bf16.mxu0 0
    %1483 = vmatpush2.bf16.msra.mxu0 %v1355
    %1484 = vmatprep.subr.bf16.mxu0 0
    %1485 = vmatpush2.bf16.msra.mxu0 %v1354
    %1486 = vmatprep.subr.bf16.mxu0 0
    %1487 = vmatpush2.bf16.msra.mxu0 %v1353
    %1488 = vmatprep.subr.bf16.mxu0 0
    %1489 = vmatpush2.bf16.msra.mxu0 %v1352
    %1490 = vmatprep.subr.bf16.mxu0 0
    %1491 = vmatpush2.bf16.msra.mxu0 %v1351
    %1492 = vmatprep.subr.bf16.mxu0 0
    %1493 = vmatpush2.bf16.msra.mxu0 %v1350
    %1494 = vmatprep.mubr.bf16.mxu0 %v1127
    %1495 = vmatmul.mubr.bf16.gmra.mxu0 %v1126
    %v1496 = vpop.f32.mrf.mxu0
    %v1497 = vadd.f32 %v1457, %v1496
    %v1498 = vpop.f32.mrf.mxu0
    %v1499 = vpop.f32.mrf.mxu0
    %v1500 = vpop.f32.mrf.mxu0
    %1501 = vdwg.mxu0
    %1502 = vmatprep.subr.bf16.mxu0 0
    %1503 = vmatpush1.bf16.msra.mxu0 %v1365
    %1504 = vmatprep.subr.bf16.mxu0 0
    %1505 = vmatpush1.bf16.msra.mxu0 %v1364
    %1506 = vmatprep.subr.bf16.mxu0 0
    %1507 = vmatpush1.bf16.msra.mxu0 %v1363
    %1508 = vmatprep.subr.bf16.mxu0 0
    %1509 = vmatpush1.bf16.msra.mxu0 %v1362
    %1510 = vmatprep.subr.bf16.mxu0 0
    %1511 = vmatpush1.bf16.msra.mxu0 %v1361
    %1512 = vmatprep.subr.bf16.mxu0 0
    %1513 = vmatpush1.bf16.msra.mxu0 %v1360
    %1514 = vmatprep.subr.bf16.mxu0 0
    %1515 = vmatpush1.bf16.msra.mxu0 %v1359
    %1516 = vmatprep.subr.bf16.mxu0 0
    %1517 = vmatpush1.bf16.msra.mxu0 %v1358
    %1518 = vmatprep.subr.bf16.mxu0 0
    %1519 = vmatpush2.bf16.msra.mxu0 %v1373
    %1520 = vmatprep.subr.bf16.mxu0 0
    %1521 = vmatpush2.bf16.msra.mxu0 %v1372
    %1522 = vmatprep.subr.bf16.mxu0 0
    %1523 = vmatpush2.bf16.msra.mxu0 %v1371
    %1524 = vmatprep.subr.bf16.mxu0 0
    %1525 = vmatpush2.bf16.msra.mxu0 %v1370
    %1526 = vmatprep.subr.bf16.mxu0 0
    %1527 = vmatpush2.bf16.msra.mxu0 %v1369
    %1528 = vmatprep.subr.bf16.mxu0 0
    %1529 = vmatpush2.bf16.msra.mxu0 %v1368
    %1530 = vmatprep.subr.bf16.mxu0 0
    %1531 = vmatpush2.bf16.msra.mxu0 %v1367
    %1532 = vmatprep.subr.bf16.mxu0 0
    %1533 = vmatpush2.bf16.msra.mxu0 %v1366
    %1534 = vmatprep.mubr.bf16.mxu0 %v1125
    %1535 = vmatmul.mubr.bf16.gmra.mxu0 %v1111
    %v1536 = vpop.f32.mrf.mxu0
    %v1537 = vadd.f32 %v1497, %v1536
    %v1538 = vpop.f32.mrf.mxu0
    %v1539 = vpop.f32.mrf.mxu0
    %v1540 = vpop.f32.mrf.mxu0
    %1541 = vdwg.mxu0
    %v1542 = vmax.f32 %v1537, 0.0
    %v1543 = vpack.c.bf16 %v1542, %v1542
    %v1544 = vld [vmem:[%s7] sm:$0xf]
    %v1545 = vld [vmem:[%s7 + $0x4] sm:$0xf]
    %v1546 = vld [vmem:[%s7 + $0x8] sm:$0xf]
    %v1547 = vld [vmem:[%s7 + $0xc] sm:$0xf]
    %v1548 = vld [vmem:[%s8] sm:$0x1]
    %v1550 = vlaneseq
    %v1551 = vshrl.u32 %v1550, 7
    %v1552 = vsub.s32 0, %v1551
    %v1553 = vrot.slane %v1548, %v1552
    %v1559 = vunpack.c.l.b16 %v1544
    %v1560 = vunpack.c.l.b16 %v1545
    %v1561 = vunpack.c.l.b16 %v1546
    %v1562 = vunpack.c.l.b16 %v1547
    %v1563 = vpack.c.b16 %v1560, %v1559
    %v1564 = vpack.c.b16 %v1562, %v1561
    %vm1567 = vcmask 261120
    %v1569 = vsel %vm1567, %v1543, 0
    %1571 = vmatprep.subr.bf16.mxu0 0
    %1572 = vmatpush1.bf16.msra.mxu0 0
    %1573 = vmatprep.subr.bf16.mxu0 0
    %1574 = vmatpush1.bf16.msra.mxu0 0
    %1575 = vmatprep.subr.bf16.mxu0 0
    %1576 = vmatpush1.bf16.msra.mxu0 0
    %1577 = vmatprep.subr.bf16.mxu0 0
    %1578 = vmatpush1.bf16.msra.mxu0 0
    %1579 = vmatprep.subr.bf16.mxu0 0
    %1580 = vmatpush1.bf16.msra.mxu0 0
    %1581 = vmatprep.subr.bf16.mxu0 0
    %1582 = vmatpush1.bf16.msra.mxu0 0
    %1583 = vmatprep.subr.bf16.mxu0 0
    %1584 = vmatpush1.bf16.msra.mxu0 %v1564
    %1585 = vmatprep.subr.bf16.mxu0 0
    %1586 = vmatpush1.bf16.msra.mxu0 %v1563
    %1587 = vmatprep.subr.bf16.mxu0 0
    %1588 = vmatpush2.bf16.msra.mxu0 0
    %1589 = vmatprep.subr.bf16.mxu0 0
    %1590 = vmatpush2.bf16.msra.mxu0 0
    %1591 = vmatprep.subr.bf16.mxu0 0
    %1592 = vmatpush2.bf16.msra.mxu0 0
    %1593 = vmatprep.subr.bf16.mxu0 0
    %1594 = vmatpush2.bf16.msra.mxu0 0
    %1595 = vmatprep.subr.bf16.mxu0 0
    %1596 = vmatpush2.bf16.msra.mxu0 0
    %1597 = vmatprep.subr.bf16.mxu0 0
    %1598 = vmatpush2.bf16.msra.mxu0 0
    %1599 = vmatprep.subr.bf16.mxu0 0
    %1600 = vmatpush2.bf16.msra.mxu0 0
    %1601 = vmatprep.subr.bf16.mxu0 0
    %1602 = vmatpush2.bf16.msra.mxu0 0
    %1603 = vmatprep.mubr.bf16.mxu0 0
    %1604 = vmatmul.mubr.bf16.gmra.mxu0 %v1569
    %v1605 = vpop.f32.mrf.mxu0
    %v1606 = vadd.f32 %v1553, %v1605
    %v1607 = vpop.f32.mrf.mxu0
    %v1608 = vpop.f32.mrf.mxu0
    %v1609 = vpop.f32.mrf.mxu0
    %1610 = vdwg.mxu0
    %1611 = vst [vmem:[#allocation7] sm:$0x3] %v1606
    // Predicated region
    $region38: #{convnet_forward.1} parent=1 // pred_check
      _
    $region39: #{convnet_forward.1} parent=1 // pred_check_branch
      %1613 = sbr.rel (0) target = $region41
    $region40: #{convnet_forward.1} parent=1 // pred_region
      %s1615 = ssub.s32 32, 32
      %1616 = vsyncadd [#allocation8], %s1615
      %s1618 = sshll.u32 [#allocation7], 4
      %s1619 = int_to_ptr.vmem [resolvable:$true] %s1618
      %1621 = dma.vmem_to_hbm [thread:$0]  %s1619, 32, %s9, [#allocation8]
    $region41: #{convnet_forward.1} parent=1 // pred_fallthru
      _
    // Predicated region
    $region42: #{convnet_forward.1} parent=1 // pred_check
      _
    $region43: #{convnet_forward.1} parent=1 // pred_check_branch
      %1623 = sbr.rel (0) target = $region45
    $region44: #{convnet_forward.1} parent=1 // pred_region
      %1624 = dma.done [#allocation8], 32
    $region45: #{convnet_forward.1} parent=1 // pred_fallthru
      _
    %1625 = vsyncpa [#allocation8], 1

</llo_original>
